<compile_context>
chip_gen: v7x
topology: tpu7x:2x2x1
jax: 0.10.0
libtpu: 0.0.40
codegen_flags: <defaults>
</compile_context>

<pallas_src>
import functools
import math

import jax
import jax.numpy as jnp
from jax import lax
from jax.experimental import pallas as pl
from jax.experimental.pallas import tpu as pltpu


def transformer_layer_kernel(
    xq_ref, xkv_ref, mask_ref,
    wq_ref, bq_ref, wk_ref, bk_ref, wv_ref, bv_ref, wf_ref, bf_ref,
    w1_ref, b1_ref, w2_ref, b2_ref,
    o_ref, *, heads, d_subspace):
  f32 = jnp.float32
  bf16 = jnp.bfloat16
  eps = f32(1e-5)

  x_q = xq_ref[0]                                 # [TQ, D] f32 residual-stream tile (queries)
  x_kv = xkv_ref[0]                               # [S,  D] f32 full sequence (K/V source)
  keep = mask_ref[0].astype(jnp.int32) != 0       # [TQ, S] bool attention mask (from int8)

  def inst_norm(x):
    # PyTorch InstanceNorm1d (affine=False, eps=1e-5) on [B, S, D] input:
    # normalizes over the last dim per (batch, token), biased variance.
    mu = jnp.mean(x, axis=-1, keepdims=True)
    var = jnp.mean(jnp.square(x - mu), axis=-1, keepdims=True)
    return (x - mu) * lax.rsqrt(var + eps)

  n_q = inst_norm(x_q).astype(bf16)               # [TQ, D]
  n_kv = inst_norm(x_kv).astype(bf16)             # [S,  D]

  scale = f32(1.0 / math.sqrt(d_subspace))

  # QKV projections (bf16 MXU inputs, f32 accumulation); fold 1/sqrt(ds) into Q once.
  xq = (jnp.dot(n_q, wq_ref[...], preferred_element_type=f32) + bq_ref[...]) * scale
  xk = jnp.dot(n_kv, wk_ref[...], preferred_element_type=f32) + bk_ref[...]
  xv = jnp.dot(n_kv, wv_ref[...], preferred_element_type=f32) + bv_ref[...]
  xq = xq.astype(bf16)
  xk = xk.astype(bf16)
  xv = xv.astype(bf16)

  # Per-head attention with the fusion projection fused into the head loop:
  # no [TQ, D] concat temporary is ever materialized.
  acc = None
  for h in range(heads):                          # heads is small -> static unroll
    lo = h * d_subspace
    hi = lo + d_subspace
    qh = xq[:, lo:hi]                             # [TQ, ds] bf16
    kh = xk[:, lo:hi]                             # [S,  ds] bf16
    vh = xv[:, lo:hi]                             # [S,  ds] bf16

    # scores = q @ k^T via dot_general contracting the last dims (no explicit transpose)
    s = lax.dot_general(qh, kh, (((1,), (1,)), ((), ())),
                        preferred_element_type=f32)            # [TQ, S] f32
    s = jnp.where(keep, s, f32(-1e9))

    # numerically-stable softmax, all in f32
    s = s - jnp.max(s, axis=-1, keepdims=True)
    p = jnp.exp(s)
    p = p * pl.reciprocal(jnp.sum(p, axis=-1, keepdims=True), approx=True)

    pv = jnp.dot(p.astype(bf16), vh, preferred_element_type=f32)        # [TQ, ds]
    contrib = jnp.dot(pv.astype(bf16), wf_ref[h],
                      preferred_element_type=f32)                       # [TQ, D]
    acc = contrib if acc is None else acc + contrib

  attn = acc + bf_ref[...]                        # [TQ, D] f32
  x1 = x_q + attn                                 # residual 1

  # Pre-norm feed-forward: Linear(D, 4D) -> ReLU -> Linear(4D, D)
  n2 = inst_norm(x1).astype(bf16)
  h1 = jnp.dot(n2, w1_ref[...], preferred_element_type=f32) + b1_ref[...]
  h1 = jnp.maximum(h1, 0.0).astype(bf16)
  ff = jnp.dot(h1, w2_ref[...], preferred_element_type=f32) + b2_ref[...]

  o_ref[0] = (x1 + ff).astype(o_ref.dtype)        # residual 2


def transformer_layer(corners, mask, params, heads, *, q_tile=None,
                      vmem_limit_bytes=None):
  """Pallas-fused TransformerLayer forward.

  corners: [B, S, D] float32; mask: [B, S, S] bool; returns [B, S, D] float32.
  """
  B, S, D = corners.shape
  assert D % heads == 0
  ds = D // heads
  DH = 4 * D

  TQ = q_tile if q_tile is not None else (S if S <= 128 else 128)
  assert S % TQ == 0, "sequence length must be divisible by the query tile"
  num_q_tiles = S // TQ

  # PyTorch nn.Linear stores weight as [out, in]; kernel computes x @ W so pass W.T,
  # pre-cast to bf16 (MXU-native, halves weight DMA). Biases stay f32.
  bf16 = jnp.bfloat16
  wq = params["WQ_w"].T.astype(bf16)                              # [D, D]
  wk = params["WK_w"].T.astype(bf16)
  wv = params["WV_w"].T.astype(bf16)
  wf = params["fusion_w"].T.reshape(heads, ds, D).astype(bf16)    # [H, ds, D] (per-head split)
  w1 = params["ff1_w"].T.astype(bf16)                             # [D, 4D]
  w2 = params["ff2_w"].T.astype(bf16)                             # [4D, D]
  bq = params["WQ_b"].reshape(1, D)
  bk = params["WK_b"].reshape(1, D)
  bv = params["WV_b"].reshape(1, D)
  bfu = params["fusion_b"].reshape(1, D)
  b1 = params["ff1_b"].reshape(1, DH)
  b2 = params["ff2_b"].reshape(1, D)

  mask_i8 = mask.astype(jnp.int8)                 # 4x less mask bandwidth than f32

  kernel = functools.partial(transformer_layer_kernel, heads=heads, d_subspace=ds)

  q_tile_map = lambda b, qi: (b, qi, 0)
  batch_full_map = lambda b, qi: (b, 0, 0)
  w_map2 = lambda b, qi: (0, 0)
  w_map3 = lambda b, qi: (0, 0, 0)

  in_specs = [
      pl.BlockSpec((1, TQ, D), q_tile_map),       # corners (query / residual tile)
      pl.BlockSpec((1, S, D), batch_full_map),    # corners (full sequence for K/V)
      pl.BlockSpec((1, TQ, S), q_tile_map),       # mask (int8)
      pl.BlockSpec((D, D), w_map2),               # WQ^T
      pl.BlockSpec((1, D), w_map2),               # bQ
      pl.BlockSpec((D, D), w_map2),               # WK^T
      pl.BlockSpec((1, D), w_map2),               # bK
      pl.BlockSpec((D, D), w_map2),               # WV^T
      pl.BlockSpec((1, D), w_map2),               # bV
      pl.BlockSpec((heads, ds, D), w_map3),       # W_fusion^T split per head
      pl.BlockSpec((1, D), w_map2),               # b_fusion
      pl.BlockSpec((D, DH), w_map2),              # FF1 W^T
      pl.BlockSpec((1, DH), w_map2),              # FF1 b
      pl.BlockSpec((DH, D), w_map2),              # FF2 W^T
      pl.BlockSpec((1, D), w_map2),               # FF2 b
  ]
  out_specs = pl.BlockSpec((1, TQ, D), q_tile_map)

  flops = 24 * B * S * D * D + 4 * B * S * S * D
  transcendentals = B * heads * S * S + 2 * B * S
  bytes_accessed = (2 * B * S * D * 4             # corners in + out (f32)
                    + B * S * S                   # int8 mask
                    + 2 * 12 * D * D              # bf16 weights
                    + 4 * (6 * D + DH))           # f32 biases

  cp_kwargs = dict(dimension_semantics=("parallel", "parallel"))
  if vmem_limit_bytes is not None:
    # v7x has 64 MiB VMEM (keep this well below); v6e can afford 64-96 MiB for larger TQ.
    cp_kwargs["vmem_limit_bytes"] = vmem_limit_bytes

  return pl.pallas_call(
      kernel,
      grid=(B, num_q_tiles),
      in_specs=in_specs,
      out_specs=out_specs,
      out_shape=jax.ShapeDtypeStruct((B, S, D), corners.dtype),
      compiler_params=pltpu.CompilerParams(**cp_kwargs),
      cost_estimate=pl.CostEstimate(
          flops=flops, transcendentals=transcendentals,
          bytes_accessed=bytes_accessed),
  )(corners, corners, mask_i8,
    wq, bq, wk, bk, wv, bv, wf, bfu, w1, b1, w2, b2)


# ----------------------------- pure-JAX reference -----------------------------

def reference_mha(q, k, v, mask, params, heads):
  B, S, D = q.shape
  ds = D // heads

  def linear(x, w, b):  # PyTorch: x @ W.T + b, W is [out, in]
    return x @ w.T + b

  xq = linear(q, params["WQ_w"], params["WQ_b"]).reshape(B, S, heads, ds).transpose(0, 2, 1, 3)
  xk = linear(k, params["WK_w"], params["WK_b"]).reshape(B, S, heads, ds).transpose(0, 2, 1, 3)
  xv = linear(v, params["WV_w"], params["WV_b"]).reshape(B, S, heads, ds).transpose(0, 2, 1, 3)
  scores = jnp.einsum("bhqd,bhkd->bhqk", xq, xk) / math.sqrt(ds)
  scores = jnp.where(mask[:, None, :, :], scores, -1e9)
  scores = jax.nn.softmax(scores, axis=-1)
  out = jnp.einsum("bhqk,bhkd->bhqd", scores, xv)
  concat = out.transpose(0, 2, 1, 3).reshape(B, S, D)
  return linear(concat, params["fusion_w"], params["fusion_b"])


def reference_transformer_layer(corners, mask, params, heads):
  def inorm(x):  # InstanceNorm1d(affine=False): normalize over the last dim, eps=1e-5
    mu = jnp.mean(x, axis=-1, keepdims=True)
    var = jnp.mean(jnp.square(x - mu), axis=-1, keepdims=True)
    return (x - mu) / jnp.sqrt(var + 1e-5)

  n1 = inorm(corners)
  x = corners + reference_mha(n1, n1, n1, mask, params, heads)
  n2 = inorm(x)
  h = jnp.maximum(n2 @ params["ff1_w"].T + params["ff1_b"], 0.0)
  return x + (h @ params["ff2_w"].T + params["ff2_b"])


def init_params(key, d_model):
  """Deterministic PyTorch-Linear-style init: uniform(-1/sqrt(in), 1/sqrt(in))."""
  specs = {
      "WQ": (d_model, d_model), "WK": (d_model, d_model),
      "WV": (d_model, d_model), "fusion": (d_model, d_model),
      "ff1": (4 * d_model, d_model), "ff2": (d_model, 4 * d_model),
  }
  params = {}
  keys = jax.random.split(key, 2 * len(specs))
  for i, (name, (out_f, in_f)) in enumerate(specs.items()):
    bound = 1.0 / math.sqrt(in_f)
    params[f"{name}_w"] = jax.random.uniform(
        keys[2 * i], (out_f, in_f), jnp.float32, -bound, bound)
    params[f"{name}_b"] = jax.random.uniform(
        keys[2 * i + 1], (out_f,), jnp.float32, -bound, bound)
  return params


if __name__ == "__main__":
  B, S, heads, d_model = 2, 8, 4, 32

  key = jax.random.PRNGKey(0)
  k_x, k_m, k_p = jax.random.split(key, 3)

  corners = jax.random.normal(k_x, (B, S, d_model), jnp.float32)
  # Boolean attention matrix [B, S, S] (True = attend); keep the diagonal True so no row
  # is fully masked.
  mask = jax.random.bernoulli(k_m, 0.7, (B, S, S)) | jnp.eye(S, dtype=bool)[None]
  params = init_params(k_p, d_model)

  out = transformer_layer(corners, mask, params, heads)
  out = jax.block_until_ready(out)

  ref = reference_transformer_layer(corners, mask, params, heads)
  assert out.shape == (B, S, d_model)
  err = float(jnp.max(jnp.abs(out - ref)))
  # bf16 MXU matmuls + approximate softmax reciprocal in the kernel vs an all-f32 reference
  assert err < 5e-2, f"mismatch vs reference: max abs err {err}"

  print("KERNEL_OK")
</pallas_src>

<mosaic_0001>
module attributes {stable_mosaic.version = 11 : i64} {
  func.func @transformer_layer_kernel(%arg0: i32, %arg1: i32, %arg2: memref<1x8x32xf32, #tpu.memory_space<vmem>>, %arg3: memref<1x8x32xf32, #tpu.memory_space<vmem>>, %arg4: memref<1x8x8xi8, #tpu.memory_space<vmem>>, %arg5: memref<32x32xbf16, #tpu.memory_space<vmem>>, %arg6: memref<1x32xf32, #tpu.memory_space<vmem>>, %arg7: memref<32x32xbf16, #tpu.memory_space<vmem>>, %arg8: memref<1x32xf32, #tpu.memory_space<vmem>>, %arg9: memref<32x32xbf16, #tpu.memory_space<vmem>>, %arg10: memref<1x32xf32, #tpu.memory_space<vmem>>, %arg11: memref<4x8x32xbf16, #tpu.memory_space<vmem>>, %arg12: memref<1x32xf32, #tpu.memory_space<vmem>>, %arg13: memref<32x128xbf16, #tpu.memory_space<vmem>>, %arg14: memref<1x128xf32, #tpu.memory_space<vmem>>, %arg15: memref<128x32xbf16, #tpu.memory_space<vmem>>, %arg16: memref<1x32xf32, #tpu.memory_space<vmem>>, %arg17: memref<1x8x32xf32, #tpu.memory_space<vmem>>) attributes {dimension_semantics = [#tpu.dimension_semantics<parallel>, #tpu.dimension_semantics<parallel>], iteration_bounds = array<i64: 2, 1>, scalar_prefetch = 0 : i64, scratch_operands = 0 : i64, tpu.core_type = #tpu.core_type<tc>, window_params = [{transform_indices = @transform_0, window_bounds = array<i64: 1, 8, 32>}, {transform_indices = @transform_1, window_bounds = array<i64: 1, 8, 32>}, {transform_indices = @transform_2, window_bounds = array<i64: 1, 8, 8>}, {pipeline_mode = #tpu.pipeline_mode<synchronous>, transform_indices = @transform_3, window_bounds = array<i64: 32, 32>}, {pipeline_mode = #tpu.pipeline_mode<synchronous>, transform_indices = @transform_4, window_bounds = array<i64: 1, 32>}, {pipeline_mode = #tpu.pipeline_mode<synchronous>, transform_indices = @transform_5, window_bounds = array<i64: 32, 32>}, {pipeline_mode = #tpu.pipeline_mode<synchronous>, transform_indices = @transform_6, window_bounds = array<i64: 1, 32>}, {pipeline_mode = #tpu.pipeline_mode<synchronous>, transform_indices = @transform_7, window_bounds = array<i64: 32, 32>}, {pipeline_mode = #tpu.pipeline_mode<synchronous>, transform_indices = @transform_8, window_bounds = array<i64: 1, 32>}, {pipeline_mode = #tpu.pipeline_mode<synchronous>, transform_indices = @transform_9, window_bounds = array<i64: 4, 8, 32>}, {pipeline_mode = #tpu.pipeline_mode<synchronous>, transform_indices = @transform_10, window_bounds = array<i64: 1, 32>}, {pipeline_mode = #tpu.pipeline_mode<synchronous>, transform_indices = @transform_11, window_bounds = array<i64: 32, 128>}, {pipeline_mode = #tpu.pipeline_mode<synchronous>, transform_indices = @transform_12, window_bounds = array<i64: 1, 128>}, {pipeline_mode = #tpu.pipeline_mode<synchronous>, transform_indices = @transform_13, window_bounds = array<i64: 128, 32>}, {pipeline_mode = #tpu.pipeline_mode<synchronous>, transform_indices = @transform_14, window_bounds = array<i64: 1, 32>}, {transform_indices = @transform_15, window_bounds = array<i64: 1, 8, 32>}]} {
    %c0 = arith.constant 0 : index
    %c0_0 = arith.constant 0 : index
    %c0_1 = arith.constant 0 : index
    %0 = vector.load %arg2[%c0, %c0_0, %c0_1] : memref<1x8x32xf32, #tpu.memory_space<vmem>>, vector<1x8x32xf32>
    %1 = vector.shape_cast %0 : vector<1x8x32xf32> to vector<8x32xf32>
    %c0_2 = arith.constant 0 : index
    %c0_3 = arith.constant 0 : index
    %c0_4 = arith.constant 0 : index
    %2 = vector.load %arg3[%c0_2, %c0_3, %c0_4] : memref<1x8x32xf32, #tpu.memory_space<vmem>>, vector<1x8x32xf32>
    %3 = vector.shape_cast %2 : vector<1x8x32xf32> to vector<8x32xf32>
    %c0_5 = arith.constant 0 : index
    %c0_6 = arith.constant 0 : index
    %c0_7 = arith.constant 0 : index
    %4 = vector.load %arg4[%c0_5, %c0_6, %c0_7] : memref<1x8x8xi8, #tpu.memory_space<vmem>>, vector<1x8x8xi8>
    %5 = vector.shape_cast %4 : vector<1x8x8xi8> to vector<8x8xi8>
    %6 = arith.extsi %5 : vector<8x8xi8> to vector<8x8xi32>
    %c0_i32 = arith.constant 0 : i32
    %7 = vector.broadcast %c0_i32 : i32 to vector<8x8xi32>
    %8 = arith.cmpi ne, %6, %7 : vector<8x8xi32>
    %cst = arith.constant dense<0.000000e+00> : vector<8xf32>
    %9 = vector.multi_reduction <add>, %1, %cst [1] : vector<8x32xf32> to vector<8xf32>
    %10 = vector.shape_cast %9 : vector<8xf32> to vector<8x1xf32>
    %cst_8 = arith.constant 3.200000e+01 : f32
    %11 = vector.broadcast %cst_8 : f32 to vector<8x1xf32>
    %12 = arith.divf %10, %11 : vector<8x1xf32>
    %13 = vector.broadcast %12 : vector<8x1xf32> to vector<8x32xf32>
    %14 = arith.subf %1, %13 : vector<8x32xf32>
    %15 = arith.mulf %14, %14 : vector<8x32xf32>
    %cst_9 = arith.constant dense<0.000000e+00> : vector<8xf32>
    %16 = vector.multi_reduction <add>, %15, %cst_9 [1] : vector<8x32xf32> to vector<8xf32>
    %17 = vector.shape_cast %16 : vector<8xf32> to vector<8x1xf32>
    %cst_10 = arith.constant 3.200000e+01 : f32
    %18 = vector.broadcast %cst_10 : f32 to vector<8x1xf32>
    %19 = arith.divf %17, %18 : vector<8x1xf32>
    %20 = vector.broadcast %12 : vector<8x1xf32> to vector<8x32xf32>
    %21 = arith.subf %1, %20 : vector<8x32xf32>
    %cst_11 = arith.constant 9.99999974E-6 : f32
    %22 = vector.broadcast %cst_11 : f32 to vector<8x1xf32>
    %23 = arith.addf %19, %22 : vector<8x1xf32>
    %24 = math.rsqrt %23 : vector<8x1xf32>
    %25 = vector.broadcast %24 : vector<8x1xf32> to vector<8x32xf32>
    %26 = arith.mulf %21, %25 : vector<8x32xf32>
    %27 = arith.truncf %26 : vector<8x32xf32> to vector<8x32xbf16>
    %cst_12 = arith.constant dense<0.000000e+00> : vector<8xf32>
    %28 = vector.multi_reduction <add>, %3, %cst_12 [1] : vector<8x32xf32> to vector<8xf32>
    %29 = vector.shape_cast %28 : vector<8xf32> to vector<8x1xf32>
    %cst_13 = arith.constant 3.200000e+01 : f32
    %30 = vector.broadcast %cst_13 : f32 to vector<8x1xf32>
    %31 = arith.divf %29, %30 : vector<8x1xf32>
    %32 = vector.broadcast %31 : vector<8x1xf32> to vector<8x32xf32>
    %33 = arith.subf %3, %32 : vector<8x32xf32>
    %34 = arith.mulf %33, %33 : vector<8x32xf32>
    %cst_14 = arith.constant dense<0.000000e+00> : vector<8xf32>
    %35 = vector.multi_reduction <add>, %34, %cst_14 [1] : vector<8x32xf32> to vector<8xf32>
    %36 = vector.shape_cast %35 : vector<8xf32> to vector<8x1xf32>
    %cst_15 = arith.constant 3.200000e+01 : f32
    %37 = vector.broadcast %cst_15 : f32 to vector<8x1xf32>
    %38 = arith.divf %36, %37 : vector<8x1xf32>
    %39 = vector.broadcast %31 : vector<8x1xf32> to vector<8x32xf32>
    %40 = arith.subf %3, %39 : vector<8x32xf32>
    %cst_16 = arith.constant 9.99999974E-6 : f32
    %41 = vector.broadcast %cst_16 : f32 to vector<8x1xf32>
    %42 = arith.addf %38, %41 : vector<8x1xf32>
    %43 = math.rsqrt %42 : vector<8x1xf32>
    %44 = vector.broadcast %43 : vector<8x1xf32> to vector<8x32xf32>
    %45 = arith.mulf %40, %44 : vector<8x32xf32>
    %46 = arith.truncf %45 : vector<8x32xf32> to vector<8x32xbf16>
    %c0_17 = arith.constant 0 : index
    %c0_18 = arith.constant 0 : index
    %47 = vector.load %arg5[%c0_17, %c0_18] : memref<32x32xbf16, #tpu.memory_space<vmem>>, vector<32x32xbf16>
    %cst_19 = arith.constant dense<0.000000e+00> : vector<8x32xf32>
    %48 = tpu.matmul %27, %47, %cst_19 {dimension_numbers = #tpu.dot_dimension_numbers<[1], [0], [0], [1], [0, 0, 1, 1], [], []>} : vector<8x32xbf16>, vector<32x32xbf16>, vector<8x32xf32> -> vector<8x32xf32>
    %c0_20 = arith.constant 0 : index
    %c0_21 = arith.constant 0 : index
    %49 = vector.load %arg6[%c0_20, %c0_21] : memref<1x32xf32, #tpu.memory_space<vmem>>, vector<1x32xf32>
    %50 = vector.broadcast %49 : vector<1x32xf32> to vector<8x32xf32>
    %51 = arith.addf %48, %50 : vector<8x32xf32>
    %cst_22 = arith.constant 0.353553385 : f32
    %52 = vector.broadcast %cst_22 : f32 to vector<8x32xf32>
    %53 = arith.mulf %51, %52 : vector<8x32xf32>
    %c0_23 = arith.constant 0 : index
    %c0_24 = arith.constant 0 : index
    %54 = vector.load %arg7[%c0_23, %c0_24] : memref<32x32xbf16, #tpu.memory_space<vmem>>, vector<32x32xbf16>
    %cst_25 = arith.constant dense<0.000000e+00> : vector<8x32xf32>
    %55 = tpu.matmul %46, %54, %cst_25 {dimension_numbers = #tpu.dot_dimension_numbers<[1], [0], [0], [1], [0, 0, 1, 1], [], []>} : vector<8x32xbf16>, vector<32x32xbf16>, vector<8x32xf32> -> vector<8x32xf32>
    %c0_26 = arith.constant 0 : index
    %c0_27 = arith.constant 0 : index
    %56 = vector.load %arg8[%c0_26, %c0_27] : memref<1x32xf32, #tpu.memory_space<vmem>>, vector<1x32xf32>
    %57 = vector.broadcast %56 : vector<1x32xf32> to vector<8x32xf32>
    %58 = arith.addf %55, %57 : vector<8x32xf32>
    %c0_28 = arith.constant 0 : index
    %c0_29 = arith.constant 0 : index
    %59 = vector.load %arg9[%c0_28, %c0_29] : memref<32x32xbf16, #tpu.memory_space<vmem>>, vector<32x32xbf16>
    %cst_30 = arith.constant dense<0.000000e+00> : vector<8x32xf32>
    %60 = tpu.matmul %46, %59, %cst_30 {dimension_numbers = #tpu.dot_dimension_numbers<[1], [0], [0], [1], [0, 0, 1, 1], [], []>} : vector<8x32xbf16>, vector<32x32xbf16>, vector<8x32xf32> -> vector<8x32xf32>
    %c0_31 = arith.constant 0 : index
    %c0_32 = arith.constant 0 : index
    %61 = vector.load %arg10[%c0_31, %c0_32] : memref<1x32xf32, #tpu.memory_space<vmem>>, vector<1x32xf32>
    %62 = vector.broadcast %61 : vector<1x32xf32> to vector<8x32xf32>
    %63 = arith.addf %60, %62 : vector<8x32xf32>
    %64 = arith.truncf %53 : vector<8x32xf32> to vector<8x32xbf16>
    %65 = arith.truncf %58 : vector<8x32xf32> to vector<8x32xbf16>
    %66 = arith.truncf %63 : vector<8x32xf32> to vector<8x32xbf16>
    %67 = vector.extract_strided_slice %64 {offsets = [0, 0], sizes = [8, 8], strides = [1, 1]} : vector<8x32xbf16> to vector<8x8xbf16>
    %68 = vector.extract_strided_slice %65 {offsets = [0, 0], sizes = [8, 8], strides = [1, 1]} : vector<8x32xbf16> to vector<8x8xbf16>
    %69 = vector.extract_strided_slice %66 {offsets = [0, 0], sizes = [8, 8], strides = [1, 1]} : vector<8x32xbf16> to vector<8x8xbf16>
    %cst_33 = arith.constant dense<0.000000e+00> : vector<8x8xf32>
    %70 = tpu.matmul %67, %68, %cst_33 {dimension_numbers = #tpu.dot_dimension_numbers<[1], [1], [0], [0], [0, 0, 1, 0], [], []>} : vector<8x8xbf16>, vector<8x8xbf16>, vector<8x8xf32> -> vector<8x8xf32>
    %cst_34 = arith.constant -1.000000e+09 : f32
    %71 = vector.broadcast %cst_34 : f32 to vector<8x8xf32>
    %72 = arith.select %8, %70, %71 : vector<8x8xi1>, vector<8x8xf32>
    %cst_35 = arith.constant dense<0xFF800000> : vector<8xf32>
    %73 = vector.multi_reduction <maximumf>, %72, %cst_35 [1] : vector<8x8xf32> to vector<8xf32>
    %74 = vector.shape_cast %73 : vector<8xf32> to vector<8x1xf32>
    %75 = vector.broadcast %74 : vector<8x1xf32> to vector<8x8xf32>
    %76 = arith.subf %72, %75 : vector<8x8xf32>
    %77 = math.exp %76 : vector<8x8xf32>
    %cst_36 = arith.constant dense<0.000000e+00> : vector<8xf32>
    %78 = vector.multi_reduction <add>, %77, %cst_36 [1] : vector<8x8xf32> to vector<8xf32>
    %79 = vector.shape_cast %78 : vector<8xf32> to vector<8x1xf32>
    %80 = tpu.reciprocal %79 {approx = true} : vector<8x1xf32> -> vector<8x1xf32>
    %81 = vector.broadcast %80 : vector<8x1xf32> to vector<8x8xf32>
    %82 = arith.mulf %77, %81 : vector<8x8xf32>
    %83 = arith.truncf %82 : vector<8x8xf32> to vector<8x8xbf16>
    %cst_37 = arith.constant dense<0.000000e+00> : vector<8x8xf32>
    %84 = tpu.matmul %83, %69, %cst_37 {dimension_numbers = #tpu.dot_dimension_numbers<[1], [0], [0], [1], [0, 0, 1, 1], [], []>} : vector<8x8xbf16>, vector<8x8xbf16>, vector<8x8xf32> -> vector<8x8xf32>
    %85 = arith.truncf %84 : vector<8x8xf32> to vector<8x8xbf16>
    %c0_38 = arith.constant 0 : index
    %c0_39 = arith.constant 0 : index
    %c0_40 = arith.constant 0 : index
    %86 = vector.load %arg11[%c0_38, %c0_39, %c0_40] : memref<4x8x32xbf16, #tpu.memory_space<vmem>>, vector<1x8x32xbf16>
    %87 = vector.shape_cast %86 : vector<1x8x32xbf16> to vector<8x32xbf16>
    %cst_41 = arith.constant dense<0.000000e+00> : vector<8x32xf32>
    %88 = tpu.matmul %85, %87, %cst_41 {dimension_numbers = #tpu.dot_dimension_numbers<[1], [0], [0], [1], [0, 0, 1, 1], [], []>} : vector<8x8xbf16>, vector<8x32xbf16>, vector<8x32xf32> -> vector<8x32xf32>
    %89 = vector.extract_strided_slice %64 {offsets = [0, 8], sizes = [8, 8], strides = [1, 1]} : vector<8x32xbf16> to vector<8x8xbf16>
    %90 = vector.extract_strided_slice %65 {offsets = [0, 8], sizes = [8, 8], strides = [1, 1]} : vector<8x32xbf16> to vector<8x8xbf16>
    %91 = vector.extract_strided_slice %66 {offsets = [0, 8], sizes = [8, 8], strides = [1, 1]} : vector<8x32xbf16> to vector<8x8xbf16>
    %cst_42 = arith.constant dense<0.000000e+00> : vector<8x8xf32>
    %92 = tpu.matmul %89, %90, %cst_42 {dimension_numbers = #tpu.dot_dimension_numbers<[1], [1], [0], [0], [0, 0, 1, 0], [], []>} : vector<8x8xbf16>, vector<8x8xbf16>, vector<8x8xf32> -> vector<8x8xf32>
    %cst_43 = arith.constant -1.000000e+09 : f32
    %93 = vector.broadcast %cst_43 : f32 to vector<8x8xf32>
    %94 = arith.select %8, %92, %93 : vector<8x8xi1>, vector<8x8xf32>
    %cst_44 = arith.constant dense<0xFF800000> : vector<8xf32>
    %95 = vector.multi_reduction <maximumf>, %94, %cst_44 [1] : vector<8x8xf32> to vector<8xf32>
    %96 = vector.shape_cast %95 : vector<8xf32> to vector<8x1xf32>
    %97 = vector.broadcast %96 : vector<8x1xf32> to vector<8x8xf32>
    %98 = arith.subf %94, %97 : vector<8x8xf32>
    %99 = math.exp %98 : vector<8x8xf32>
    %cst_45 = arith.constant dense<0.000000e+00> : vector<8xf32>
    %100 = vector.multi_reduction <add>, %99, %cst_45 [1] : vector<8x8xf32> to vector<8xf32>
    %101 = vector.shape_cast %100 : vector<8xf32> to vector<8x1xf32>
    %102 = tpu.reciprocal %101 {approx = true} : vector<8x1xf32> -> vector<8x1xf32>
    %103 = vector.broadcast %102 : vector<8x1xf32> to vector<8x8xf32>
    %104 = arith.mulf %99, %103 : vector<8x8xf32>
    %105 = arith.truncf %104 : vector<8x8xf32> to vector<8x8xbf16>
    %cst_46 = arith.constant dense<0.000000e+00> : vector<8x8xf32>
    %106 = tpu.matmul %105, %91, %cst_46 {dimension_numbers = #tpu.dot_dimension_numbers<[1], [0], [0], [1], [0, 0, 1, 1], [], []>} : vector<8x8xbf16>, vector<8x8xbf16>, vector<8x8xf32> -> vector<8x8xf32>
    %107 = arith.truncf %106 : vector<8x8xf32> to vector<8x8xbf16>
    %c1 = arith.constant 1 : index
    %c0_47 = arith.constant 0 : index
    %c0_48 = arith.constant 0 : index
    %108 = vector.load %arg11[%c1, %c0_47, %c0_48] : memref<4x8x32xbf16, #tpu.memory_space<vmem>>, vector<1x8x32xbf16>
    %109 = vector.shape_cast %108 : vector<1x8x32xbf16> to vector<8x32xbf16>
    %cst_49 = arith.constant dense<0.000000e+00> : vector<8x32xf32>
    %110 = tpu.matmul %107, %109, %cst_49 {dimension_numbers = #tpu.dot_dimension_numbers<[1], [0], [0], [1], [0, 0, 1, 1], [], []>} : vector<8x8xbf16>, vector<8x32xbf16>, vector<8x32xf32> -> vector<8x32xf32>
    %111 = arith.addf %88, %110 : vector<8x32xf32>
    %112 = vector.extract_strided_slice %64 {offsets = [0, 16], sizes = [8, 8], strides = [1, 1]} : vector<8x32xbf16> to vector<8x8xbf16>
    %113 = vector.extract_strided_slice %65 {offsets = [0, 16], sizes = [8, 8], strides = [1, 1]} : vector<8x32xbf16> to vector<8x8xbf16>
    %114 = vector.extract_strided_slice %66 {offsets = [0, 16], sizes = [8, 8], strides = [1, 1]} : vector<8x32xbf16> to vector<8x8xbf16>
    %cst_50 = arith.constant dense<0.000000e+00> : vector<8x8xf32>
    %115 = tpu.matmul %112, %113, %cst_50 {dimension_numbers = #tpu.dot_dimension_numbers<[1], [1], [0], [0], [0, 0, 1, 0], [], []>} : vector<8x8xbf16>, vector<8x8xbf16>, vector<8x8xf32> -> vector<8x8xf32>
    %cst_51 = arith.constant -1.000000e+09 : f32
    %116 = vector.broadcast %cst_51 : f32 to vector<8x8xf32>
    %117 = arith.select %8, %115, %116 : vector<8x8xi1>, vector<8x8xf32>
    %cst_52 = arith.constant dense<0xFF800000> : vector<8xf32>
    %118 = vector.multi_reduction <maximumf>, %117, %cst_52 [1] : vector<8x8xf32> to vector<8xf32>
    %119 = vector.shape_cast %118 : vector<8xf32> to vector<8x1xf32>
    %120 = vector.broadcast %119 : vector<8x1xf32> to vector<8x8xf32>
    %121 = arith.subf %117, %120 : vector<8x8xf32>
    %122 = math.exp %121 : vector<8x8xf32>
    %cst_53 = arith.constant dense<0.000000e+00> : vector<8xf32>
    %123 = vector.multi_reduction <add>, %122, %cst_53 [1] : vector<8x8xf32> to vector<8xf32>
    %124 = vector.shape_cast %123 : vector<8xf32> to vector<8x1xf32>
    %125 = tpu.reciprocal %124 {approx = true} : vector<8x1xf32> -> vector<8x1xf32>
    %126 = vector.broadcast %125 : vector<8x1xf32> to vector<8x8xf32>
    %127 = arith.mulf %122, %126 : vector<8x8xf32>
    %128 = arith.truncf %127 : vector<8x8xf32> to vector<8x8xbf16>
    %cst_54 = arith.constant dense<0.000000e+00> : vector<8x8xf32>
    %129 = tpu.matmul %128, %114, %cst_54 {dimension_numbers = #tpu.dot_dimension_numbers<[1], [0], [0], [1], [0, 0, 1, 1], [], []>} : vector<8x8xbf16>, vector<8x8xbf16>, vector<8x8xf32> -> vector<8x8xf32>
    %130 = arith.truncf %129 : vector<8x8xf32> to vector<8x8xbf16>
    %c2 = arith.constant 2 : index
    %c0_55 = arith.constant 0 : index
    %c0_56 = arith.constant 0 : index
    %131 = vector.load %arg11[%c2, %c0_55, %c0_56] : memref<4x8x32xbf16, #tpu.memory_space<vmem>>, vector<1x8x32xbf16>
    %132 = vector.shape_cast %131 : vector<1x8x32xbf16> to vector<8x32xbf16>
    %cst_57 = arith.constant dense<0.000000e+00> : vector<8x32xf32>
    %133 = tpu.matmul %130, %132, %cst_57 {dimension_numbers = #tpu.dot_dimension_numbers<[1], [0], [0], [1], [0, 0, 1, 1], [], []>} : vector<8x8xbf16>, vector<8x32xbf16>, vector<8x32xf32> -> vector<8x32xf32>
    %134 = arith.addf %111, %133 : vector<8x32xf32>
    %135 = vector.extract_strided_slice %64 {offsets = [0, 24], sizes = [8, 8], strides = [1, 1]} : vector<8x32xbf16> to vector<8x8xbf16>
    %136 = vector.extract_strided_slice %65 {offsets = [0, 24], sizes = [8, 8], strides = [1, 1]} : vector<8x32xbf16> to vector<8x8xbf16>
    %137 = vector.extract_strided_slice %66 {offsets = [0, 24], sizes = [8, 8], strides = [1, 1]} : vector<8x32xbf16> to vector<8x8xbf16>
    %cst_58 = arith.constant dense<0.000000e+00> : vector<8x8xf32>
    %138 = tpu.matmul %135, %136, %cst_58 {dimension_numbers = #tpu.dot_dimension_numbers<[1], [1], [0], [0], [0, 0, 1, 0], [], []>} : vector<8x8xbf16>, vector<8x8xbf16>, vector<8x8xf32> -> vector<8x8xf32>
    %cst_59 = arith.constant -1.000000e+09 : f32
    %139 = vector.broadcast %cst_59 : f32 to vector<8x8xf32>
    %140 = arith.select %8, %138, %139 : vector<8x8xi1>, vector<8x8xf32>
    %cst_60 = arith.constant dense<0xFF800000> : vector<8xf32>
    %141 = vector.multi_reduction <maximumf>, %140, %cst_60 [1] : vector<8x8xf32> to vector<8xf32>
    %142 = vector.shape_cast %141 : vector<8xf32> to vector<8x1xf32>
    %143 = vector.broadcast %142 : vector<8x1xf32> to vector<8x8xf32>
    %144 = arith.subf %140, %143 : vector<8x8xf32>
    %145 = math.exp %144 : vector<8x8xf32>
    %cst_61 = arith.constant dense<0.000000e+00> : vector<8xf32>
    %146 = vector.multi_reduction <add>, %145, %cst_61 [1] : vector<8x8xf32> to vector<8xf32>
    %147 = vector.shape_cast %146 : vector<8xf32> to vector<8x1xf32>
    %148 = tpu.reciprocal %147 {approx = true} : vector<8x1xf32> -> vector<8x1xf32>
    %149 = vector.broadcast %148 : vector<8x1xf32> to vector<8x8xf32>
    %150 = arith.mulf %145, %149 : vector<8x8xf32>
    %151 = arith.truncf %150 : vector<8x8xf32> to vector<8x8xbf16>
    %cst_62 = arith.constant dense<0.000000e+00> : vector<8x8xf32>
    %152 = tpu.matmul %151, %137, %cst_62 {dimension_numbers = #tpu.dot_dimension_numbers<[1], [0], [0], [1], [0, 0, 1, 1], [], []>} : vector<8x8xbf16>, vector<8x8xbf16>, vector<8x8xf32> -> vector<8x8xf32>
    %153 = arith.truncf %152 : vector<8x8xf32> to vector<8x8xbf16>
    %c3 = arith.constant 3 : index
    %c0_63 = arith.constant 0 : index
    %c0_64 = arith.constant 0 : index
    %154 = vector.load %arg11[%c3, %c0_63, %c0_64] : memref<4x8x32xbf16, #tpu.memory_space<vmem>>, vector<1x8x32xbf16>
    %155 = vector.shape_cast %154 : vector<1x8x32xbf16> to vector<8x32xbf16>
    %cst_65 = arith.constant dense<0.000000e+00> : vector<8x32xf32>
    %156 = tpu.matmul %153, %155, %cst_65 {dimension_numbers = #tpu.dot_dimension_numbers<[1], [0], [0], [1], [0, 0, 1, 1], [], []>} : vector<8x8xbf16>, vector<8x32xbf16>, vector<8x32xf32> -> vector<8x32xf32>
    %157 = arith.addf %134, %156 : vector<8x32xf32>
    %c0_66 = arith.constant 0 : index
    %c0_67 = arith.constant 0 : index
    %158 = vector.load %arg12[%c0_66, %c0_67] : memref<1x32xf32, #tpu.memory_space<vmem>>, vector<1x32xf32>
    %159 = vector.broadcast %158 : vector<1x32xf32> to vector<8x32xf32>
    %160 = arith.addf %157, %159 : vector<8x32xf32>
    %161 = arith.addf %1, %160 : vector<8x32xf32>
    %cst_68 = arith.constant dense<0.000000e+00> : vector<8xf32>
    %162 = vector.multi_reduction <add>, %161, %cst_68 [1] : vector<8x32xf32> to vector<8xf32>
    %163 = vector.shape_cast %162 : vector<8xf32> to vector<8x1xf32>
    %cst_69 = arith.constant 3.200000e+01 : f32
    %164 = vector.broadcast %cst_69 : f32 to vector<8x1xf32>
    %165 = arith.divf %163, %164 : vector<8x1xf32>
    %166 = vector.broadcast %165 : vector<8x1xf32> to vector<8x32xf32>
    %167 = arith.subf %161, %166 : vector<8x32xf32>
    %168 = arith.mulf %167, %167 : vector<8x32xf32>
    %cst_70 = arith.constant dense<0.000000e+00> : vector<8xf32>
    %169 = vector.multi_reduction <add>, %168, %cst_70 [1] : vector<8x32xf32> to vector<8xf32>
    %170 = vector.shape_cast %169 : vector<8xf32> to vector<8x1xf32>
    %cst_71 = arith.constant 3.200000e+01 : f32
    %171 = vector.broadcast %cst_71 : f32 to vector<8x1xf32>
    %172 = arith.divf %170, %171 : vector<8x1xf32>
    %173 = vector.broadcast %165 : vector<8x1xf32> to vector<8x32xf32>
    %174 = arith.subf %161, %173 : vector<8x32xf32>
    %cst_72 = arith.constant 9.99999974E-6 : f32
    %175 = vector.broadcast %cst_72 : f32 to vector<8x1xf32>
    %176 = arith.addf %172, %175 : vector<8x1xf32>
    %177 = math.rsqrt %176 : vector<8x1xf32>
    %178 = vector.broadcast %177 : vector<8x1xf32> to vector<8x32xf32>
    %179 = arith.mulf %174, %178 : vector<8x32xf32>
    %180 = arith.truncf %179 : vector<8x32xf32> to vector<8x32xbf16>
    %c0_73 = arith.constant 0 : index
    %c0_74 = arith.constant 0 : index
    %181 = vector.load %arg13[%c0_73, %c0_74] : memref<32x128xbf16, #tpu.memory_space<vmem>>, vector<32x128xbf16>
    %cst_75 = arith.constant dense<0.000000e+00> : vector<8x128xf32>
    %182 = tpu.matmul %180, %181, %cst_75 {dimension_numbers = #tpu.dot_dimension_numbers<[1], [0], [0], [1], [0, 0, 1, 1], [], []>} : vector<8x32xbf16>, vector<32x128xbf16>, vector<8x128xf32> -> vector<8x128xf32>
    %c0_76 = arith.constant 0 : index
    %c0_77 = arith.constant 0 : index
    %183 = vector.load %arg14[%c0_76, %c0_77] : memref<1x128xf32, #tpu.memory_space<vmem>>, vector<1x128xf32>
    %184 = vector.broadcast %183 : vector<1x128xf32> to vector<8x128xf32>
    %185 = arith.addf %182, %184 : vector<8x128xf32>
    %cst_78 = arith.constant 0.000000e+00 : f32
    %186 = vector.broadcast %cst_78 : f32 to vector<8x128xf32>
    %187 = arith.maximumf %185, %186 : vector<8x128xf32>
    %188 = arith.truncf %187 : vector<8x128xf32> to vector<8x128xbf16>
    %c0_79 = arith.constant 0 : index
    %c0_80 = arith.constant 0 : index
    %189 = vector.load %arg15[%c0_79, %c0_80] : memref<128x32xbf16, #tpu.memory_space<vmem>>, vector<128x32xbf16>
    %cst_81 = arith.constant dense<0.000000e+00> : vector<8x32xf32>
    %190 = tpu.matmul %188, %189, %cst_81 {dimension_numbers = #tpu.dot_dimension_numbers<[1], [0], [0], [1], [0, 0, 1, 1], [], []>} : vector<8x128xbf16>, vector<128x32xbf16>, vector<8x32xf32> -> vector<8x32xf32>
    %c0_82 = arith.constant 0 : index
    %c0_83 = arith.constant 0 : index
    %191 = vector.load %arg16[%c0_82, %c0_83] : memref<1x32xf32, #tpu.memory_space<vmem>>, vector<1x32xf32>
    %192 = vector.broadcast %191 : vector<1x32xf32> to vector<8x32xf32>
    %193 = arith.addf %190, %192 : vector<8x32xf32>
    %194 = arith.addf %161, %193 : vector<8x32xf32>
    %c0_84 = arith.constant 0 : index
    %c0_85 = arith.constant 0 : index
    %c0_86 = arith.constant 0 : index
    %195 = vector.load %arg17[%c0_84, %c0_85, %c0_86] : memref<1x8x32xf32, #tpu.memory_space<vmem>>, vector<1x8x32xf32>
    %196 = vector.shape_cast %195 : vector<1x8x32xf32> to vector<8x32xf32>
    %197 = vector.shape_cast %194 : vector<8x32xf32> to vector<1x8x32xf32>
    tpu.vector_store %arg17[%c0_84, %c0_85, %c0_86], %197 {strides = array<i32>} : memref<1x8x32xf32, #tpu.memory_space<vmem>>, vector<1x8x32xf32>,
    return
  }
  func.func @transform_0(%arg0: i32, %arg1: i32) -> (i32, i32, i32) {
    %c0_i32 = arith.constant 0 : i32
    %c0_i32_0 = arith.constant 0 : i32
    return %arg0, %arg1, %c0_i32 : i32, i32, i32
  }
  func.func @transform_1(%arg0: i32, %arg1: i32) -> (i32, i32, i32) {
    %c0_i32 = arith.constant 0 : i32
    %c0_i32_0 = arith.constant 0 : i32
    %c0_i32_1 = arith.constant 0 : i32
    return %arg0, %c0_i32, %c0_i32_0 : i32, i32, i32
  }
  func.func @transform_2(%arg0: i32, %arg1: i32) -> (i32, i32, i32) {
    %c0_i32 = arith.constant 0 : i32
    %c0_i32_0 = arith.constant 0 : i32
    return %arg0, %arg1, %c0_i32 : i32, i32, i32
  }
  func.func @transform_3(%arg0: i32, %arg1: i32) -> (i32, i32) {
    %c0_i32 = arith.constant 0 : i32
    %c0_i32_0 = arith.constant 0 : i32
    %c0_i32_1 = arith.constant 0 : i32
    return %c0_i32, %c0_i32_0 : i32, i32
  }
  func.func @transform_4(%arg0: i32, %arg1: i32) -> (i32, i32) {
    %c0_i32 = arith.constant 0 : i32
    %c0_i32_0 = arith.constant 0 : i32
    %c0_i32_1 = arith.constant 0 : i32
    return %c0_i32, %c0_i32_0 : i32, i32
  }
  func.func @transform_5(%arg0: i32, %arg1: i32) -> (i32, i32) {
    %c0_i32 = arith.constant 0 : i32
    %c0_i32_0 = arith.constant 0 : i32
    %c0_i32_1 = arith.constant 0 : i32
    return %c0_i32, %c0_i32_0 : i32, i32
  }
  func.func @transform_6(%arg0: i32, %arg1: i32) -> (i32, i32) {
    %c0_i32 = arith.constant 0 : i32
    %c0_i32_0 = arith.constant 0 : i32
    %c0_i32_1 = arith.constant 0 : i32
    return %c0_i32, %c0_i32_0 : i32, i32
  }
  func.func @transform_7(%arg0: i32, %arg1: i32) -> (i32, i32) {
    %c0_i32 = arith.constant 0 : i32
    %c0_i32_0 = arith.constant 0 : i32
    %c0_i32_1 = arith.constant 0 : i32
    return %c0_i32, %c0_i32_0 : i32, i32
  }
  func.func @transform_8(%arg0: i32, %arg1: i32) -> (i32, i32) {
    %c0_i32 = arith.constant 0 : i32
    %c0_i32_0 = arith.constant 0 : i32
    %c0_i32_1 = arith.constant 0 : i32
    return %c0_i32, %c0_i32_0 : i32, i32
  }
  func.func @transform_9(%arg0: i32, %arg1: i32) -> (i32, i32, i32) {
    %c0_i32 = arith.constant 0 : i32
    %c0_i32_0 = arith.constant 0 : i32
    %c0_i32_1 = arith.constant 0 : i32
    %c0_i32_2 = arith.constant 0 : i32
    return %c0_i32, %c0_i32_0, %c0_i32_1 : i32, i32, i32
  }
  func.func @transform_10(%arg0: i32, %arg1: i32) -> (i32, i32) {
    %c0_i32 = arith.constant 0 : i32
    %c0_i32_0 = arith.constant 0 : i32
    %c0_i32_1 = arith.constant 0 : i32
    return %c0_i32, %c0_i32_0 : i32, i32
  }
  func.func @transform_11(%arg0: i32, %arg1: i32) -> (i32, i32) {
    %c0_i32 = arith.constant 0 : i32
    %c0_i32_0 = arith.constant 0 : i32
    %c0_i32_1 = arith.constant 0 : i32
    return %c0_i32, %c0_i32_0 : i32, i32
  }
  func.func @transform_12(%arg0: i32, %arg1: i32) -> (i32, i32) {
    %c0_i32 = arith.constant 0 : i32
    %c0_i32_0 = arith.constant 0 : i32
    %c0_i32_1 = arith.constant 0 : i32
    return %c0_i32, %c0_i32_0 : i32, i32
  }
  func.func @transform_13(%arg0: i32, %arg1: i32) -> (i32, i32) {
    %c0_i32 = arith.constant 0 : i32
    %c0_i32_0 = arith.constant 0 : i32
    %c0_i32_1 = arith.constant 0 : i32
    return %c0_i32, %c0_i32_0 : i32, i32
  }
  func.func @transform_14(%arg0: i32, %arg1: i32) -> (i32, i32) {
    %c0_i32 = arith.constant 0 : i32
    %c0_i32_0 = arith.constant 0 : i32
    %c0_i32_1 = arith.constant 0 : i32
    return %c0_i32, %c0_i32_0 : i32, i32
  }
  func.func @transform_15(%arg0: i32, %arg1: i32) -> (i32, i32, i32) {
    %c0_i32 = arith.constant 0 : i32
    %c0_i32_0 = arith.constant 0 : i32
    return %arg0, %arg1, %c0_i32 : i32, i32, i32
  }
}

</mosaic_0001>

<llo_original>
// kernel: tpu_custom_call.1
$region0: #{tpu_custom_call.1}
  #allocation0 [shape = 'u32[]', space=smem, size = 0x4, offset = 0x4, fixed_abs, tag = 'smem constant byte address 0x4 - core index']
  #allocation1 [shape = 'u32[144,128]{1,0:T(1,128)}', space=vmem, size = 0x12000, scoped, tag = 'internal scratch']
  %s0 = inlined_call_operand.vmem [shape: f32[2,8,32], index: 0, kind: input, shape index: {}]
  %s1 = inlined_call_operand.vmem [shape: f32[2,8,32], index: 1, kind: input, shape index: {}]
  %s2 = inlined_call_operand.hbm [shape: s8[2,8,8], index: 2, kind: input, shape index: {}]
  %s3 = inlined_call_operand.vmem [shape: bf16[32,32], index: 3, kind: input, shape index: {}]
  %s4 = inlined_call_operand.vmem [shape: f32[1,32], index: 4, kind: input, shape index: {}]
  %s5 = inlined_call_operand.vmem [shape: bf16[32,32], index: 5, kind: input, shape index: {}]
  %s6 = inlined_call_operand.vmem [shape: f32[1,32], index: 6, kind: input, shape index: {}]
  %s7 = inlined_call_operand.vmem [shape: bf16[32,32], index: 7, kind: input, shape index: {}]
  %s8 = inlined_call_operand.hbm [shape: f32[1,32], index: 8, kind: input, shape index: {}]
  %s9 = inlined_call_operand.vmem [shape: bf16[4,8,32], index: 9, kind: input, shape index: {}]
  %s10 = inlined_call_operand.vmem [shape: f32[1,32], index: 10, kind: input, shape index: {}]
  %s11 = inlined_call_operand.hbm [shape: bf16[32,128], index: 11, kind: input, shape index: {}]
  %s12 = inlined_call_operand.vmem [shape: f32[1,128], index: 12, kind: input, shape index: {}]
  %s13 = inlined_call_operand.vmem [shape: bf16[128,32], index: 13, kind: input, shape index: {}]
  %s14 = inlined_call_operand.vmem [shape: f32[1,32], index: 14, kind: input, shape index: {}]
  %s15 = inlined_call_operand.hbm [shape: f32[2,8,32], index: 15, kind: output, shape index: {}]
  %s16 = sld [smem:[#allocation0]]
  $region105: #{tpu_custom_call.1} parent=0
    _
  %s18 = ssub.s32 1, %s16
  %s19 = scalar_select 0, %s18, %s16
  $region1: #{tpu_custom_call.1} parent=0
    #allocation2 [shape = 'u8[2048]{0}', space=vmem, size = 0x800, scoped, tag = 'input window, operand 2']
    #allocation3 [shape = 's32[2]{0}', space=sflag, size = 0x8, scoped, tag = 'scoped memory for tpu_custom_call.1']
    #allocation4 [shape = 's32[2]{0}', space=sflag, size = 0x8, scoped, tag = 'scoped memory for tpu_custom_call.1']
    #allocation5 [shape = 'u8[512]{0}', space=vmem, size = 0x400, scoped, tag = 'input window, operand 8, single buffered']
    #allocation6 [shape = 's32[1]{0}', space=sflag, size = 0x4, scoped, tag = 'scoped memory for tpu_custom_call.1']
    #allocation7 [shape = 'u8[8192]{0}', space=vmem, size = 0x2000, scoped, tag = 'input window, operand 11, single buffered']
    #allocation8 [shape = 'u8[8192]{0}', space=vmem, size = 0x2000, scoped, tag = 'output window, operand 0']
    %20 = vsyncpa [#allocation3], 0
    %s21 = scalar_lea.sflag [#allocation3], 1
    %22 = vsyncpa %s21, 0
    %23 = vsyncpa [#allocation6], 0
    %24 = vsyncpa [#allocation4], 0
    %s25 = scalar_lea.sflag [#allocation4], 1
    %26 = vsyncpa %s25, 0
    loop: start=0, step=1, limit=4
    $region2: #{tpu_custom_call.1} parent=1 // loop_pre_header
      _
    $region3: #{tpu_custom_call.1} parent=1 // loop_header
      %s28 = sphi 0, %s32
      %p29 = scmp.ge.s32.totalorder %s28, 4
      %s35 = sphi 0, %s47
      %s36 = sphi 0, %s43
      %s37 = sphi 0, %s35
      %s38 = sphi 0, %s36
      %s39 = sphi 0, %s37
      %s40 = sphi 0, %s38
      %s52 = sphi 0, %s54
      %s55 = sphi 0, %s52
      %s56 = sphi 0, %s55
      %s72 = sphi 0, %s56
      %s78 = sphi 0, %s80
      %s81 = sphi 0, %s78
      %s82 = sphi 0, %s81
      %s98 = sphi 0, %s82
      %s106 = sphi 0, %s108
      %s109 = sphi 0, %s106
      %s110 = sphi 0, %s109
      %s126 = sphi 0, %s110
      %s130 = sphi 0, %s130
      %s132 = sphi 0, %s130
      %s133 = sphi 0, %s132
      %s147 = sphi 0, %s133
      %s151 = sphi 0, %s151
      %s153 = sphi 0, %s151
      %s154 = sphi 0, %s153
      %s168 = sphi 0, %s154
      %s172 = sphi 0, %s172
      %s174 = sphi 0, %s172
      %s175 = sphi 0, %s174
      %s189 = sphi 0, %s175
      %s193 = sphi 0, %s193
      %s195 = sphi 0, %s193
      %s196 = sphi 0, %s195
      %s210 = sphi 0, %s196
      %s214 = sphi 0, %s214
      %s216 = sphi 0, %s214
      %s217 = sphi 0, %s216
      %s231 = sphi 0, %s217
      %s235 = sphi 0, %s235
      %s237 = sphi 0, %s235
      %s238 = sphi 0, %s237
      %s252 = sphi 0, %s238
      %s256 = sphi 0, %s256
      %s258 = sphi 0, %s256
      %s259 = sphi 0, %s258
      %s273 = sphi 0, %s259
      %s277 = sphi 0, %s277
      %s279 = sphi 0, %s277
      %s280 = sphi 0, %s279
      %s294 = sphi 0, %s280
      %s298 = sphi 0, %s298
      %s300 = sphi 0, %s298
      %s301 = sphi 0, %s300
      %s315 = sphi 0, %s301
      %s319 = sphi 0, %s319
      %s321 = sphi 0, %s319
      %s322 = sphi 0, %s321
      %s336 = sphi 0, %s322
      %s340 = sphi 0, %s340
      %s342 = sphi 0, %s340
      %s343 = sphi 0, %s342
      %s357 = sphi 0, %s343
      %s361 = sphi 0, %s361
      %s363 = sphi 0, %s361
      %s364 = sphi 0, %s363
      %s378 = sphi 0, %s364
      %s386 = sphi 0, %s388
      %s389 = sphi 0, %s386
      %s390 = sphi 0, %s389
      %s406 = sphi 0, %s390
    $region4: #{tpu_custom_call.1} parent=1 // loop_header_branch
      %31 = sbr.rel (%p29) target = $region8
    $region5: #{tpu_custom_call.1} parent=1 // loop_body
      %s33 = ssub.s32 %s28, 1
      %s34 = ssub.s32 %s28, 2
      %s41 = sadd.s32 1, %s36
      %p42 = scmp.ge.s32.totalorder %s41, 1
      %s43 = scalar_select %p42, 0, %s41
      %s44 = sadd.s32 1, %s35
      %s45 = scalar_select %p42, %s44, %s35
      %p46 = scmp.ge.s32.totalorder %s45, 2
      %s47 = scalar_select %p46, 0, %s45
      %s48 = ssub.s32 %s35, %s47
      %s49 = ssub.s32 %s36, %s43
      %s50 = sor.u32 %s48, %s49
      %p51 = scmp.eq.s32.totalorder %s50, 0
      %s53 = sadd.s32 %s52, 1
      %s54 = scalar_select %p51, %s52, %s53
      %p57 = pneg %p51
      %p58 = scmp.eq.s32.totalorder %s28, 1
      %p59 = por %p57, %p58
      %p60 = scmp.ne.s32.totalorder %s52, %s55
      %p61 = scmp.eq.s32.totalorder %s28, 0
      %p62 = por %p60, %p61
      %p63 = scmp.ne.s32.totalorder %s52, %s55
      %p64 = scmp.eq.s32.totalorder %s33, 1
      %p65 = por %p63, %p64
      %p66 = scmp.ne.s32.totalorder %s55, %s56
      %p67 = scmp.eq.s32.totalorder %s33, 0
      %p68 = por %p66, %p67
      %p69 = scmp.ne.s32.totalorder %s55, %s56
      %p70 = scmp.eq.s32.totalorder %s34, 1
      %p71 = por %p69, %p70
      %p73 = scmp.ne.s32.totalorder %s56, %s72
      %p74 = scmp.eq.s32.totalorder %s34, 0
      %p75 = por %p73, %p74
      %s76 = ssub.s32 %s35, %s47
      %p77 = scmp.eq.s32.totalorder %s76, 0
      %s79 = sadd.s32 %s78, 1
      %s80 = scalar_select %p77, %s78, %s79
      %p83 = pneg %p77
      %p84 = scmp.eq.s32.totalorder %s28, 1
      %p85 = por %p83, %p84
      %p86 = scmp.ne.s32.totalorder %s78, %s81
      %p87 = scmp.eq.s32.totalorder %s28, 0
      %p88 = por %p86, %p87
      %p89 = scmp.ne.s32.totalorder %s78, %s81
      %p90 = scmp.eq.s32.totalorder %s33, 1
      %p91 = por %p89, %p90
      %p92 = scmp.ne.s32.totalorder %s81, %s82
      %p93 = scmp.eq.s32.totalorder %s33, 0
      %p94 = por %p92, %p93
      %p95 = scmp.ne.s32.totalorder %s81, %s82
      %p96 = scmp.eq.s32.totalorder %s34, 1
      %p97 = por %p95, %p96
      %p99 = scmp.ne.s32.totalorder %s82, %s98
      %p100 = scmp.eq.s32.totalorder %s34, 0
      %p101 = por %p99, %p100
      %s102 = ssub.s32 %s35, %s47
      %s103 = ssub.s32 %s36, %s43
      %s104 = sor.u32 %s102, %s103
      %p105 = scmp.eq.s32.totalorder %s104, 0
      %s107 = sadd.s32 %s106, 1
      %s108 = scalar_select %p105, %s106, %s107
      %p111 = pneg %p105
      %p112 = scmp.eq.s32.totalorder %s28, 1
      %p113 = por %p111, %p112
      %p114 = scmp.ne.s32.totalorder %s106, %s109
      %p115 = scmp.eq.s32.totalorder %s28, 0
      %p116 = por %p114, %p115
      %p117 = scmp.ne.s32.totalorder %s106, %s109
      %p118 = scmp.eq.s32.totalorder %s33, 1
      %p119 = por %p117, %p118
      %p120 = scmp.ne.s32.totalorder %s109, %s110
      %p121 = scmp.eq.s32.totalorder %s33, 0
      %p122 = por %p120, %p121
      %p123 = scmp.ne.s32.totalorder %s109, %s110
      %p124 = scmp.eq.s32.totalorder %s34, 1
      %p125 = por %p123, %p124
      %p127 = scmp.ne.s32.totalorder %s110, %s126
      %p128 = scmp.eq.s32.totalorder %s34, 0
      %p129 = por %p127, %p128
      %s131 = sadd.s32 %s130, 1
      %p134 = scmp.eq.s32.totalorder %s28, 1
      %p135 = scmp.ne.s32.totalorder %s130, %s132
      %p136 = scmp.eq.s32.totalorder %s28, 0
      %p137 = por %p135, %p136
      %p138 = scmp.ne.s32.totalorder %s130, %s132
      %p139 = scmp.eq.s32.totalorder %s33, 1
      %p140 = por %p138, %p139
      %p141 = scmp.ne.s32.totalorder %s132, %s133
      %p142 = scmp.eq.s32.totalorder %s33, 0
      %p143 = por %p141, %p142
      %p144 = scmp.ne.s32.totalorder %s132, %s133
      %p145 = scmp.eq.s32.totalorder %s34, 1
      %p146 = por %p144, %p145
      %p148 = scmp.ne.s32.totalorder %s133, %s147
      %p149 = scmp.eq.s32.totalorder %s34, 0
      %p150 = por %p148, %p149
      %s152 = sadd.s32 %s151, 1
      %p155 = scmp.eq.s32.totalorder %s28, 1
      %p156 = scmp.ne.s32.totalorder %s151, %s153
      %p157 = scmp.eq.s32.totalorder %s28, 0
      %p158 = por %p156, %p157
      %p159 = scmp.ne.s32.totalorder %s151, %s153
      %p160 = scmp.eq.s32.totalorder %s33, 1
      %p161 = por %p159, %p160
      %p162 = scmp.ne.s32.totalorder %s153, %s154
      %p163 = scmp.eq.s32.totalorder %s33, 0
      %p164 = por %p162, %p163
      %p165 = scmp.ne.s32.totalorder %s153, %s154
      %p166 = scmp.eq.s32.totalorder %s34, 1
      %p167 = por %p165, %p166
      %p169 = scmp.ne.s32.totalorder %s154, %s168
      %p170 = scmp.eq.s32.totalorder %s34, 0
      %p171 = por %p169, %p170
      %s173 = sadd.s32 %s172, 1
      %p176 = scmp.eq.s32.totalorder %s28, 1
      %p177 = scmp.ne.s32.totalorder %s172, %s174
      %p178 = scmp.eq.s32.totalorder %s28, 0
      %p179 = por %p177, %p178
      %p180 = scmp.ne.s32.totalorder %s172, %s174
      %p181 = scmp.eq.s32.totalorder %s33, 1
      %p182 = por %p180, %p181
      %p183 = scmp.ne.s32.totalorder %s174, %s175
      %p184 = scmp.eq.s32.totalorder %s33, 0
      %p185 = por %p183, %p184
      %p186 = scmp.ne.s32.totalorder %s174, %s175
      %p187 = scmp.eq.s32.totalorder %s34, 1
      %p188 = por %p186, %p187
      %p190 = scmp.ne.s32.totalorder %s175, %s189
      %p191 = scmp.eq.s32.totalorder %s34, 0
      %p192 = por %p190, %p191
      %s194 = sadd.s32 %s193, 1
      %p197 = scmp.eq.s32.totalorder %s28, 1
      %p198 = scmp.ne.s32.totalorder %s193, %s195
      %p199 = scmp.eq.s32.totalorder %s28, 0
      %p200 = por %p198, %p199
      %p201 = scmp.ne.s32.totalorder %s193, %s195
      %p202 = scmp.eq.s32.totalorder %s33, 1
      %p203 = por %p201, %p202
      %p204 = scmp.ne.s32.totalorder %s195, %s196
      %p205 = scmp.eq.s32.totalorder %s33, 0
      %p206 = por %p204, %p205
      %p207 = scmp.ne.s32.totalorder %s195, %s196
      %p208 = scmp.eq.s32.totalorder %s34, 1
      %p209 = por %p207, %p208
      %p211 = scmp.ne.s32.totalorder %s196, %s210
      %p212 = scmp.eq.s32.totalorder %s34, 0
      %p213 = por %p211, %p212
      %s215 = sadd.s32 %s214, 1
      %p218 = scmp.eq.s32.totalorder %s28, 1
      %p219 = scmp.ne.s32.totalorder %s214, %s216
      %p220 = scmp.eq.s32.totalorder %s28, 0
      %p221 = por %p219, %p220
      %p222 = scmp.ne.s32.totalorder %s214, %s216
      %p223 = scmp.eq.s32.totalorder %s33, 1
      %p224 = por %p222, %p223
      %p225 = scmp.ne.s32.totalorder %s216, %s217
      %p226 = scmp.eq.s32.totalorder %s33, 0
      %p227 = por %p225, %p226
      %p228 = scmp.ne.s32.totalorder %s216, %s217
      %p229 = scmp.eq.s32.totalorder %s34, 1
      %p230 = por %p228, %p229
      %p232 = scmp.ne.s32.totalorder %s217, %s231
      %p233 = scmp.eq.s32.totalorder %s34, 0
      %p234 = por %p232, %p233
      %s236 = sadd.s32 %s235, 1
      %p239 = scmp.eq.s32.totalorder %s28, 1
      %p240 = scmp.ne.s32.totalorder %s235, %s237
      %p241 = scmp.eq.s32.totalorder %s28, 0
      %p242 = por %p240, %p241
      %p243 = scmp.ne.s32.totalorder %s235, %s237
      %p244 = scmp.eq.s32.totalorder %s33, 1
      %p245 = por %p243, %p244
      %p246 = scmp.ne.s32.totalorder %s237, %s238
      %p247 = scmp.eq.s32.totalorder %s33, 0
      %p248 = por %p246, %p247
      %p249 = scmp.ne.s32.totalorder %s237, %s238
      %p250 = scmp.eq.s32.totalorder %s34, 1
      %p251 = por %p249, %p250
      %p253 = scmp.ne.s32.totalorder %s238, %s252
      %p254 = scmp.eq.s32.totalorder %s34, 0
      %p255 = por %p253, %p254
      %s257 = sadd.s32 %s256, 1
      %p260 = scmp.eq.s32.totalorder %s28, 1
      %p261 = scmp.ne.s32.totalorder %s256, %s258
      %p262 = scmp.eq.s32.totalorder %s28, 0
      %p263 = por %p261, %p262
      %p264 = scmp.ne.s32.totalorder %s256, %s258
      %p265 = scmp.eq.s32.totalorder %s33, 1
      %p266 = por %p264, %p265
      %p267 = scmp.ne.s32.totalorder %s258, %s259
      %p268 = scmp.eq.s32.totalorder %s33, 0
      %p269 = por %p267, %p268
      %p270 = scmp.ne.s32.totalorder %s258, %s259
      %p271 = scmp.eq.s32.totalorder %s34, 1
      %p272 = por %p270, %p271
      %p274 = scmp.ne.s32.totalorder %s259, %s273
      %p275 = scmp.eq.s32.totalorder %s34, 0
      %p276 = por %p274, %p275
      %s278 = sadd.s32 %s277, 1
      %p281 = scmp.eq.s32.totalorder %s28, 1
      %p282 = scmp.ne.s32.totalorder %s277, %s279
      %p283 = scmp.eq.s32.totalorder %s28, 0
      %p284 = por %p282, %p283
      %p285 = scmp.ne.s32.totalorder %s277, %s279
      %p286 = scmp.eq.s32.totalorder %s33, 1
      %p287 = por %p285, %p286
      %p288 = scmp.ne.s32.totalorder %s279, %s280
      %p289 = scmp.eq.s32.totalorder %s33, 0
      %p290 = por %p288, %p289
      %p291 = scmp.ne.s32.totalorder %s279, %s280
      %p292 = scmp.eq.s32.totalorder %s34, 1
      %p293 = por %p291, %p292
      %p295 = scmp.ne.s32.totalorder %s280, %s294
      %p296 = scmp.eq.s32.totalorder %s34, 0
      %p297 = por %p295, %p296
      %s299 = sadd.s32 %s298, 1
      %p302 = scmp.eq.s32.totalorder %s28, 1
      %p303 = scmp.ne.s32.totalorder %s298, %s300
      %p304 = scmp.eq.s32.totalorder %s28, 0
      %p305 = por %p303, %p304
      %p306 = scmp.ne.s32.totalorder %s298, %s300
      %p307 = scmp.eq.s32.totalorder %s33, 1
      %p308 = por %p306, %p307
      %p309 = scmp.ne.s32.totalorder %s300, %s301
      %p310 = scmp.eq.s32.totalorder %s33, 0
      %p311 = por %p309, %p310
      %p312 = scmp.ne.s32.totalorder %s300, %s301
      %p313 = scmp.eq.s32.totalorder %s34, 1
      %p314 = por %p312, %p313
      %p316 = scmp.ne.s32.totalorder %s301, %s315
      %p317 = scmp.eq.s32.totalorder %s34, 0
      %p318 = por %p316, %p317
      %s320 = sadd.s32 %s319, 1
      %p323 = scmp.eq.s32.totalorder %s28, 1
      %p324 = scmp.ne.s32.totalorder %s319, %s321
      %p325 = scmp.eq.s32.totalorder %s28, 0
      %p326 = por %p324, %p325
      %p327 = scmp.ne.s32.totalorder %s319, %s321
      %p328 = scmp.eq.s32.totalorder %s33, 1
      %p329 = por %p327, %p328
      %p330 = scmp.ne.s32.totalorder %s321, %s322
      %p331 = scmp.eq.s32.totalorder %s33, 0
      %p332 = por %p330, %p331
      %p333 = scmp.ne.s32.totalorder %s321, %s322
      %p334 = scmp.eq.s32.totalorder %s34, 1
      %p335 = por %p333, %p334
      %p337 = scmp.ne.s32.totalorder %s322, %s336
      %p338 = scmp.eq.s32.totalorder %s34, 0
      %p339 = por %p337, %p338
      %s341 = sadd.s32 %s340, 1
      %p344 = scmp.eq.s32.totalorder %s28, 1
      %p345 = scmp.ne.s32.totalorder %s340, %s342
      %p346 = scmp.eq.s32.totalorder %s28, 0
      %p347 = por %p345, %p346
      %p348 = scmp.ne.s32.totalorder %s340, %s342
      %p349 = scmp.eq.s32.totalorder %s33, 1
      %p350 = por %p348, %p349
      %p351 = scmp.ne.s32.totalorder %s342, %s343
      %p352 = scmp.eq.s32.totalorder %s33, 0
      %p353 = por %p351, %p352
      %p354 = scmp.ne.s32.totalorder %s342, %s343
      %p355 = scmp.eq.s32.totalorder %s34, 1
      %p356 = por %p354, %p355
      %p358 = scmp.ne.s32.totalorder %s343, %s357
      %p359 = scmp.eq.s32.totalorder %s34, 0
      %p360 = por %p358, %p359
      %s362 = sadd.s32 %s361, 1
      %p365 = scmp.eq.s32.totalorder %s28, 1
      %p366 = scmp.ne.s32.totalorder %s361, %s363
      %p367 = scmp.eq.s32.totalorder %s28, 0
      %p368 = por %p366, %p367
      %p369 = scmp.ne.s32.totalorder %s361, %s363
      %p370 = scmp.eq.s32.totalorder %s33, 1
      %p371 = por %p369, %p370
      %p372 = scmp.ne.s32.totalorder %s363, %s364
      %p373 = scmp.eq.s32.totalorder %s33, 0
      %p374 = por %p372, %p373
      %p375 = scmp.ne.s32.totalorder %s363, %s364
      %p376 = scmp.eq.s32.totalorder %s34, 1
      %p377 = por %p375, %p376
      %p379 = scmp.ne.s32.totalorder %s364, %s378
      %p380 = scmp.eq.s32.totalorder %s34, 0
      %p381 = por %p379, %p380
      %s382 = ssub.s32 %s35, %s47
      %s383 = ssub.s32 %s36, %s43
      %s384 = sor.u32 %s382, %s383
      %p385 = scmp.eq.s32.totalorder %s384, 0
      %s387 = sadd.s32 %s386, 1
      %s388 = scalar_select %p385, %s386, %s387
      %p391 = pneg %p385
      %p392 = scmp.eq.s32.totalorder %s28, 1
      %p393 = por %p391, %p392
      %p394 = scmp.ne.s32.totalorder %s386, %s389
      %p395 = scmp.eq.s32.totalorder %s28, 0
      %p396 = por %p394, %p395
      %p397 = scmp.ne.s32.totalorder %s386, %s389
      %p398 = scmp.eq.s32.totalorder %s33, 1
      %p399 = por %p397, %p398
      %p400 = scmp.ne.s32.totalorder %s389, %s390
      %p401 = scmp.eq.s32.totalorder %s33, 0
      %p402 = por %p400, %p401
      %p403 = scmp.ne.s32.totalorder %s389, %s390
      %p404 = scmp.eq.s32.totalorder %s34, 1
      %p405 = por %p403, %p404
      %p407 = scmp.ne.s32.totalorder %s390, %s406
      %p408 = scmp.eq.s32.totalorder %s34, 0
      %p409 = por %p407, %p408
      %p410 = scmp.le.s32.totalorder 1, %s28
      %p411 = scmp.lt.s32.totalorder %s28, 3
      %p412 = pnand %p410, %p411
      %p413 = pneg %p412
      // Predicated region
      $region9: #{tpu_custom_call.1} parent=5 // pred_check
        _
      $region10: #{tpu_custom_call.1} parent=5 // pred_check_branch
        %415 = sbr.rel (%p412) target = $region12
      $region11: #{tpu_custom_call.1} parent=5 // pred_region
        %s416 = ssub.s32 %s28, 1
        // Predicated region
        $region13: #{tpu_custom_call.1} parent=11 // pred_check
          %p417 = pneg %p143
        $region14: #{tpu_custom_call.1} parent=11 // pred_check_branch
          %419 = sbr.rel (%p417) target = $region16
        $region15: #{tpu_custom_call.1} parent=11 // pred_region
          _
        $region16: #{tpu_custom_call.1} parent=11 // pred_fallthru
          _
        // Predicated region
        $region17: #{tpu_custom_call.1} parent=11 // pred_check
          %p420 = pneg %p164
        $region18: #{tpu_custom_call.1} parent=11 // pred_check_branch
          %422 = sbr.rel (%p420) target = $region20
        $region19: #{tpu_custom_call.1} parent=11 // pred_region
          _
        $region20: #{tpu_custom_call.1} parent=11 // pred_fallthru
          _
        // Predicated region
        $region21: #{tpu_custom_call.1} parent=11 // pred_check
          %p423 = pneg %p185
        $region22: #{tpu_custom_call.1} parent=11 // pred_check_branch
          %425 = sbr.rel (%p423) target = $region24
        $region23: #{tpu_custom_call.1} parent=11 // pred_region
          _
        $region24: #{tpu_custom_call.1} parent=11 // pred_fallthru
          _
        // Predicated region
        $region25: #{tpu_custom_call.1} parent=11 // pred_check
          %p426 = pneg %p206
        $region26: #{tpu_custom_call.1} parent=11 // pred_check_branch
          %428 = sbr.rel (%p426) target = $region28
        $region27: #{tpu_custom_call.1} parent=11 // pred_region
          _
        $region28: #{tpu_custom_call.1} parent=11 // pred_fallthru
          _
        // Predicated region
        $region29: #{tpu_custom_call.1} parent=11 // pred_check
          %p429 = pneg %p227
        $region30: #{tpu_custom_call.1} parent=11 // pred_check_branch
          %431 = sbr.rel (%p429) target = $region32
        $region31: #{tpu_custom_call.1} parent=11 // pred_region
          _
        $region32: #{tpu_custom_call.1} parent=11 // pred_fallthru
          _
        // Predicated region
        $region33: #{tpu_custom_call.1} parent=11 // pred_check
          %p432 = pneg %p248
        $region34: #{tpu_custom_call.1} parent=11 // pred_check_branch
          %434 = sbr.rel (%p432) target = $region36
        $region35: #{tpu_custom_call.1} parent=11 // pred_region
          %s436 = ssub.s32 16, 16
          %437 = vsyncadd [#allocation6], %s436
          %s439 = sshll.u32 [#allocation5], 4
          %s440 = int_to_ptr.vmem [resolvable:$true] %s439
          %442 = dma.hbm_to_vmem [thread:$0]  %s8, 16, %s440, [#allocation6]
        $region36: #{tpu_custom_call.1} parent=11 // pred_fallthru
          _
        // Predicated region
        $region37: #{tpu_custom_call.1} parent=11 // pred_check
          %p443 = pneg %p269
        $region38: #{tpu_custom_call.1} parent=11 // pred_check_branch
          %445 = sbr.rel (%p443) target = $region40
        $region39: #{tpu_custom_call.1} parent=11 // pred_region
          _
        $region40: #{tpu_custom_call.1} parent=11 // pred_fallthru
          _
        // Predicated region
        $region41: #{tpu_custom_call.1} parent=11 // pred_check
          %p446 = pneg %p290
        $region42: #{tpu_custom_call.1} parent=11 // pred_check_branch
          %448 = sbr.rel (%p446) target = $region44
        $region43: #{tpu_custom_call.1} parent=11 // pred_region
          _
        $region44: #{tpu_custom_call.1} parent=11 // pred_fallthru
          _
        // Predicated region
        $region45: #{tpu_custom_call.1} parent=11 // pred_check
          %p449 = pneg %p311
        $region46: #{tpu_custom_call.1} parent=11 // pred_check_branch
          %451 = sbr.rel (%p449) target = $region48
        $region47: #{tpu_custom_call.1} parent=11 // pred_region
          %s453 = ssub.s32 256, 256
          %454 = vsyncadd [#allocation6], %s453
          %s455 = sshll.u32 [#allocation7], 4
          %s456 = int_to_ptr.vmem [resolvable:$true] %s455
          %461 = dma.hbm_to_vmem [thread:$0]  %s11, 256, %s456, [#allocation6], 64, 64, 4
        $region48: #{tpu_custom_call.1} parent=11 // pred_fallthru
          _
        // Predicated region
        $region49: #{tpu_custom_call.1} parent=11 // pred_check
          %p462 = pneg %p332
        $region50: #{tpu_custom_call.1} parent=11 // pred_check_branch
          %464 = sbr.rel (%p462) target = $region52
        $region51: #{tpu_custom_call.1} parent=11 // pred_region
          _
        $region52: #{tpu_custom_call.1} parent=11 // pred_fallthru
          _
        // Predicated region
        $region53: #{tpu_custom_call.1} parent=11 // pred_check
          %p465 = pneg %p353
        $region54: #{tpu_custom_call.1} parent=11 // pred_check_branch
          %467 = sbr.rel (%p465) target = $region56
        $region55: #{tpu_custom_call.1} parent=11 // pred_region
          _
        $region56: #{tpu_custom_call.1} parent=11 // pred_fallthru
          _
        // Predicated region
        $region57: #{tpu_custom_call.1} parent=11 // pred_check
          %p468 = pneg %p374
        $region58: #{tpu_custom_call.1} parent=11 // pred_check_branch
          %470 = sbr.rel (%p468) target = $region60
        $region59: #{tpu_custom_call.1} parent=11 // pred_region
          _
        $region60: #{tpu_custom_call.1} parent=11 // pred_fallthru
          _
      $region12: #{tpu_custom_call.1} parent=5 // pred_fallthru
        _
      %p471 = scmp.lt.s32.totalorder %s28, 2
      // Predicated region
      $region61: #{tpu_custom_call.1} parent=5 // pred_check
        %p472 = pneg %p471
      $region62: #{tpu_custom_call.1} parent=5 // pred_check_branch
        %474 = sbr.rel (%p472) target = $region64
      $region63: #{tpu_custom_call.1} parent=5 // pred_region
        // Predicated region
        $region65: #{tpu_custom_call.1} parent=63 // pred_check
          %p475 = pneg %p62
        $region66: #{tpu_custom_call.1} parent=63 // pred_check_branch
          %477 = sbr.rel (%p475) target = $region68
        $region67: #{tpu_custom_call.1} parent=63 // pred_region
          %p478 = scmp.lt.s32.totalorder %s35, 1
          %s479 = scalar_select %p478, %s35, 1
          %p480 = scmp.lt.s32.totalorder %s36, 0
          %s481 = scalar_select %p480, %s36, 0
          %s482 = sadd.s32 %s481, %s479
          %s483 = smul.addr %s482, 8
          %s484 = scalar_lea.vmem %s0, %s483
        $region68: #{tpu_custom_call.1} parent=63 // pred_fallthru
          _
        // Predicated region
        $region69: #{tpu_custom_call.1} parent=63 // pred_check
          %p485 = pneg %p88
        $region70: #{tpu_custom_call.1} parent=63 // pred_check_branch
          %487 = sbr.rel (%p485) target = $region72
        $region71: #{tpu_custom_call.1} parent=63 // pred_region
          %p488 = scmp.lt.s32.totalorder %s35, 1
          %s489 = scalar_select %p488, %s35, 1
          %s490 = smul.addr %s489, 8
          %s491 = scalar_lea.vmem %s1, %s490
        $region72: #{tpu_custom_call.1} parent=63 // pred_fallthru
          _
        // Predicated region
        $region73: #{tpu_custom_call.1} parent=63 // pred_check
          %p492 = pneg %p116
        $region74: #{tpu_custom_call.1} parent=63 // pred_check_branch
          %494 = sbr.rel (%p492) target = $region76
        $region75: #{tpu_custom_call.1} parent=63 // pred_region
          %s495 = sand.u32 %s106, 1
          %s496 = scalar_lea.sflag [#allocation3], %s495
          %s497 = sand.u32 %s106, 1
          %s498 = smul.addr %s497, 2
          %s499 = scalar_lea.vmem [#allocation2], %s498
          %s501 = ssub.s32 32, 32
          %502 = vsyncadd %s496, %s501
          %s503 = sadd.s32 %s36, %s35
          %s504 = smul.addr %s503, 32
          %s505 = scalar_lea.hbm %s2, %s504
          %s507 = sshll.u32 %s499, 4
          %s508 = int_to_ptr.vmem [resolvable:$true] %s507
          %510 = dma.hbm_to_vmem [thread:$0]  %s505, 32, %s508, %s496
        $region76: #{tpu_custom_call.1} parent=63 // pred_fallthru
          _
      $region64: #{tpu_custom_call.1} parent=5 // pred_fallthru
        _
      %p511 = scmp.le.s32.totalorder 1, %s28
      %p512 = scmp.lt.s32.totalorder %s28, 3
      %p513 = pnand %p511, %p512
      %p514 = pneg %p513
      // Predicated region
      $region77: #{tpu_custom_call.1} parent=5 // pred_check
        _
      $region78: #{tpu_custom_call.1} parent=5 // pred_check_branch
        %516 = sbr.rel (%p513) target = $region80
      $region79: #{tpu_custom_call.1} parent=5 // pred_region
        %s517 = ssub.s32 %s28, 1
        %s518 = sand.u32 %s109, 1
        %s519 = scalar_lea.sflag [#allocation3], %s518
        %s520 = sand.u32 %s109, 1
        %s521 = smul.addr %s520, 2
        %s522 = scalar_lea.vmem [#allocation2], %s521
        // Predicated region
        $region81: #{tpu_custom_call.1} parent=79 // pred_check
          %p523 = pneg %p122
        $region82: #{tpu_custom_call.1} parent=79 // pred_check_branch
          %525 = sbr.rel (%p523) target = $region84
        $region83: #{tpu_custom_call.1} parent=79 // pred_region
          %526 = dma.done %s519, 32
        $region84: #{tpu_custom_call.1} parent=79 // pred_fallthru
          _
        // Predicated region
        $region85: #{tpu_custom_call.1} parent=79 // pred_check
          %p527 = pneg %p248
        $region86: #{tpu_custom_call.1} parent=79 // pred_check_branch
          %529 = sbr.rel (%p527) target = $region88
        $region87: #{tpu_custom_call.1} parent=79 // pred_region
          %530 = dma.done [#allocation6], 16
        $region88: #{tpu_custom_call.1} parent=79 // pred_fallthru
          _
        // Predicated region
        $region89: #{tpu_custom_call.1} parent=79 // pred_check
          %p531 = pneg %p311
        $region90: #{tpu_custom_call.1} parent=79 // pred_check_branch
          %533 = sbr.rel (%p531) target = $region92
        $region91: #{tpu_custom_call.1} parent=79 // pred_region
          %534 = dma.done [#allocation6], 256
        $region92: #{tpu_custom_call.1} parent=79 // pred_fallthru
          _
        %p535 = scmp.lt.s32.totalorder %s37, 1
        %s536 = scalar_select %p535, %s37, 1
        %p537 = scmp.lt.s32.totalorder %s38, 0
        %s538 = scalar_select %p537, %s38, 0
        %s539 = sadd.s32 %s538, %s536
        %s540 = smul.addr %s539, 8
        %s541 = scalar_lea.vmem %s0, %s540
        %p542 = pneg %p68
        %p543 = pneg %p65
        %p544 = scmp.lt.s32.totalorder %s37, 1
        %s545 = scalar_select %p544, %s37, 1
        %s546 = smul.addr %s545, 8
        %s547 = scalar_lea.vmem %s1, %s546
        %p548 = pneg %p94
        %p549 = pneg %p91
        %s550 = sand.u32 %s109, 1
        %s551 = scalar_lea.sflag [#allocation3], %s550
        %s552 = sand.u32 %s109, 1
        %s553 = smul.addr %s552, 2
        %s554 = scalar_lea.vmem [#allocation2], %s553
        %p555 = pneg %p122
        %p556 = pneg %p119
        %p557 = pneg %p143
        %p558 = pneg %p140
        %p559 = pneg %p164
        %p560 = pneg %p161
        %p561 = pneg %p185
        %p562 = pneg %p182
        %p563 = pneg %p206
        %p564 = pneg %p203
        %p565 = pneg %p227
        %p566 = pneg %p224
        %p567 = pneg %p248
        %p568 = pneg %p245
        %p569 = pneg %p269
        %p570 = pneg %p266
        %p571 = pneg %p290
        %p572 = pneg %p287
        %p573 = pneg %p311
        %p574 = pneg %p308
        %p575 = pneg %p332
        %p576 = pneg %p329
        %p577 = pneg %p353
        %p578 = pneg %p350
        %p579 = pneg %p374
        %p580 = pneg %p371
        %p581 = pneg %p402
        %p582 = pneg %p399
        %s583 = sand.u32 %s389, 1
        %s584 = scalar_lea.sflag [#allocation4], %s583
        %s585 = sand.u32 %s389, 1
        %s586 = smul.addr %s585, 8
        %s587 = scalar_lea.vmem [#allocation8], %s586
        %p588 = scmp.lt.s32.totalorder %s37, 1
        %s589 = scalar_select %p588, %s37, 1
        %p590 = scmp.lt.s32.totalorder %s38, 0
        %s591 = scalar_select %p590, %s38, 0
        %s592 = sadd.s32 %s591, %s589
        %s593 = smul.addr %s592, 8
        %s594 = scalar_lea.vmem %s0, %s593
        %p595 = scmp.lt.s32.totalorder %s37, 1
        %s596 = scalar_select %p595, %s37, 1
        %s597 = smul.addr %s596, 8
        %s598 = scalar_lea.vmem %s1, %s597
        %v600 = vld [vmem:[%s594] sm:$0xff]
        %v601 = vld [vmem:[%s598] sm:$0xff]
        %v602 = vld [vmem:[%s522] sm:$0x3]
        %v603 = vunpack.c.0.s8 %v602
        %vm604 = vcmp.ne.s32.totalorder %v603, 0
        %vm605 = vcmask 261120
        %v606 = vsel %vm605, %v600, 0.0
        %607 = vadd.xlane.f32.xlu0 %v606
        %v608 = vpop.xlane.xlu0 %607
        %v609 = vrcp.pop 32.0
        %v610 = vmul.f32 %v608, %v609
        %v611 = vsub.f32 %v600, %v610
        %v612 = vmul.f32 %v611, %v611
        %v613 = vsel %vm605, %v612, 0.0
        %614 = vadd.xlane.f32.xlu0 %v613
        %v615 = vpop.xlane.xlu0 %614
        %v616 = vmul.f32 %v615, %v609
        %v617 = vadd.f32 %v616, 1e-05
        %v618 = vrsqrt.pop %v617
        %v619 = vmul.f32 %v611, %v618
        %v620 = vpack.c.bf16 %v619, %v619
        %v621 = vsel %vm605, %v601, 0.0
        %622 = vadd.xlane.f32.xlu0 %v621
        %v623 = vpop.xlane.xlu0 %622
        %v624 = vmul.f32 %v623, %v609
        %v625 = vsub.f32 %v601, %v624
        %v626 = vmul.f32 %v625, %v625
        %v627 = vsel %vm605, %v626, 0.0
        %628 = vadd.xlane.f32.xlu0 %v627
        %v629 = vpop.xlane.xlu0 %628
        %v630 = vmul.f32 %v629, %v609
        %v631 = vadd.f32 %v630, 1e-05
        %v632 = vrsqrt.pop %v631
        %v633 = vmul.f32 %v625, %v632
        %v634 = vpack.c.bf16 %v633, %v633
        %v635 = vld [vmem:[%s3] sm:$0xf]
        %v636 = vld [vmem:[%s3 + $0x4] sm:$0xf]
        %v637 = vld [vmem:[%s3 + $0x8] sm:$0xf]
        %v638 = vld [vmem:[%s3 + $0xc] sm:$0xf]
        %v639 = vld [vmem:[%s4] sm:$0x1]
        %v641 = vlaneseq
        %v642 = vshrl.u32 %v641, 7
        %v643 = vsub.s32 0, %v642
        %v644 = vrot.slane %v639, %v643
        %v650 = vunpack.c.l.b16 %v635
        %v651 = vunpack.c.l.b16 %v636
        %v652 = vunpack.c.l.b16 %v637
        %v653 = vunpack.c.l.b16 %v638
        %v654 = vpack.c.b16 %v651, %v650
        %v655 = vpack.c.b16 %v653, %v652
        %v659 = vsel %vm605, %v620, 0
        %661 = vmatprep.subr.bf16.mxu0 0
        %662 = vmatpush1.bf16.msra.mxu0 %v654
        %663 = vmatprep.subr.bf16.mxu0 0
        %664 = vmatpush1.bf16.msra.mxu0 %v655
        %665 = vmatprep.subr.bf16.mxu0 0
        %666 = vmatpush1.bf16.msra.mxu0 0
        %667 = vmatprep.subr.bf16.mxu0 0
        %668 = vmatpush1.bf16.msra.mxu0 0
        %669 = vmatprep.subr.bf16.mxu0 0
        %670 = vmatpush1.bf16.msra.mxu0 0
        %671 = vmatprep.subr.bf16.mxu0 0
        %672 = vmatpush1.bf16.msra.mxu0 0
        %673 = vmatprep.subr.bf16.mxu0 0
        %674 = vmatpush1.bf16.msra.mxu0 0
        %675 = vmatprep.subr.bf16.mxu0 0
        %676 = vmatpush1.bf16.msra.mxu0 0
        %677 = vmatprep.subr.bf16.mxu0 0
        %678 = vmatpush1.bf16.msra.mxu0 0
        %679 = vmatprep.subr.bf16.mxu0 0
        %680 = vmatpush1.bf16.msra.mxu0 0
        %681 = vmatprep.subr.bf16.mxu0 0
        %682 = vmatpush1.bf16.msra.mxu0 0
        %683 = vmatprep.subr.bf16.mxu0 0
        %684 = vmatpush1.bf16.msra.mxu0 0
        %685 = vmatprep.subr.bf16.mxu0 0
        %686 = vmatpush1.bf16.msra.mxu0 0
        %687 = vmatprep.subr.bf16.mxu0 0
        %688 = vmatpush1.bf16.msra.mxu0 0
        %689 = vmatprep.subr.bf16.mxu0 0
        %690 = vmatpush1.bf16.msra.mxu0 0
        %691 = vmatprep.subr.bf16.mxu0 0
        %692 = vmatpush1.bf16.msra.mxu0 0
        %693 = vmatprep.mubr.bf16.mxu0 0
        %694 = vmatmul.mubr.bf16.gmra.mrb[0].mxu0 %v659
        %v695 = vpop.f32.mrb[0].mxu0
        %v696 = vadd.f32 %v644, %v695
        %v697 = vpop.f32.mrb[0].mxu0
        %v698 = vpop.f32.mrb[0].mxu0
        %v699 = vpop.f32.mrb[0].mxu0
        %700 = vdwg.mxu0
        %v701 = vmul.f32 %v696, 0.35355338
        %v702 = vld [vmem:[%s5] sm:$0xf]
        %v703 = vld [vmem:[%s5 + $0x4] sm:$0xf]
        %v704 = vld [vmem:[%s5 + $0x8] sm:$0xf]
        %v705 = vld [vmem:[%s5 + $0xc] sm:$0xf]
        %v706 = vld [vmem:[%s6] sm:$0x1]
        %v708 = vlaneseq
        %v709 = vshrl.u32 %v708, 7
        %v710 = vsub.s32 0, %v709
        %v711 = vrot.slane %v706, %v710
        %v717 = vunpack.c.l.b16 %v702
        %v718 = vunpack.c.l.b16 %v703
        %v719 = vunpack.c.l.b16 %v704
        %v720 = vunpack.c.l.b16 %v705
        %v721 = vpack.c.b16 %v718, %v717
        %v722 = vpack.c.b16 %v720, %v719
        %v726 = vsel %vm605, %v634, 0
        %728 = vmatprep.subr.bf16.mxu0 0
        %729 = vmatpush1.bf16.msra.mxu0 %v721
        %730 = vmatprep.subr.bf16.mxu0 0
        %731 = vmatpush1.bf16.msra.mxu0 %v722
        %732 = vmatprep.subr.bf16.mxu0 0
        %733 = vmatpush1.bf16.msra.mxu0 0
        %734 = vmatprep.subr.bf16.mxu0 0
        %735 = vmatpush1.bf16.msra.mxu0 0
        %736 = vmatprep.subr.bf16.mxu0 0
        %737 = vmatpush1.bf16.msra.mxu0 0
        %738 = vmatprep.subr.bf16.mxu0 0
        %739 = vmatpush1.bf16.msra.mxu0 0
        %740 = vmatprep.subr.bf16.mxu0 0
        %741 = vmatpush1.bf16.msra.mxu0 0
        %742 = vmatprep.subr.bf16.mxu0 0
        %743 = vmatpush1.bf16.msra.mxu0 0
        %744 = vmatprep.subr.bf16.mxu0 0
        %745 = vmatpush1.bf16.msra.mxu0 0
        %746 = vmatprep.subr.bf16.mxu0 0
        %747 = vmatpush1.bf16.msra.mxu0 0
        %748 = vmatprep.subr.bf16.mxu0 0
        %749 = vmatpush1.bf16.msra.mxu0 0
        %750 = vmatprep.subr.bf16.mxu0 0
        %751 = vmatpush1.bf16.msra.mxu0 0
        %752 = vmatprep.subr.bf16.mxu0 0
        %753 = vmatpush1.bf16.msra.mxu0 0
        %754 = vmatprep.subr.bf16.mxu0 0
        %755 = vmatpush1.bf16.msra.mxu0 0
        %756 = vmatprep.subr.bf16.mxu0 0
        %757 = vmatpush1.bf16.msra.mxu0 0
        %758 = vmatprep.subr.bf16.mxu0 0
        %759 = vmatpush1.bf16.msra.mxu0 0
        %760 = vmatprep.mubr.bf16.mxu0 0
        %761 = vmatmul.mubr.bf16.gmra.mrb[0].mxu0 %v726
        %v762 = vpop.f32.mrb[0].mxu0
        %v763 = vadd.f32 %v711, %v762
        %v764 = vpop.f32.mrb[0].mxu0
        %v765 = vpop.f32.mrb[0].mxu0
        %v766 = vpop.f32.mrb[0].mxu0
        %767 = vdwg.mxu0
        %v768 = vld [vmem:[%s7] sm:$0xf]
        %v769 = vld [vmem:[%s7 + $0x4] sm:$0xf]
        %v770 = vld [vmem:[%s7 + $0x8] sm:$0xf]
        %v771 = vld [vmem:[%s7 + $0xc] sm:$0xf]
        %v772 = vld [vmem:[#allocation5] sm:$0x1]
        %v774 = vlaneseq
        %v775 = vshrl.u32 %v774, 7
        %v776 = vsub.s32 0, %v775
        %v777 = vrot.slane %v772, %v776
        %v783 = vunpack.c.l.b16 %v768
        %v784 = vunpack.c.l.b16 %v769
        %v785 = vunpack.c.l.b16 %v770
        %v786 = vunpack.c.l.b16 %v771
        %v787 = vpack.c.b16 %v784, %v783
        %v788 = vpack.c.b16 %v786, %v785
        %791 = vmatprep.subr.bf16.mxu0 0
        %792 = vmatpush1.bf16.msra.mxu0 %v787
        %793 = vmatprep.subr.bf16.mxu0 0
        %794 = vmatpush1.bf16.msra.mxu0 %v788
        %795 = vmatprep.subr.bf16.mxu0 0
        %796 = vmatpush1.bf16.msra.mxu0 0
        %797 = vmatprep.subr.bf16.mxu0 0
        %798 = vmatpush1.bf16.msra.mxu0 0
        %799 = vmatprep.subr.bf16.mxu0 0
        %800 = vmatpush1.bf16.msra.mxu0 0
        %801 = vmatprep.subr.bf16.mxu0 0
        %802 = vmatpush1.bf16.msra.mxu0 0
        %803 = vmatprep.subr.bf16.mxu0 0
        %804 = vmatpush1.bf16.msra.mxu0 0
        %805 = vmatprep.subr.bf16.mxu0 0
        %806 = vmatpush1.bf16.msra.mxu0 0
        %807 = vmatprep.subr.bf16.mxu0 0
        %808 = vmatpush1.bf16.msra.mxu0 0
        %809 = vmatprep.subr.bf16.mxu0 0
        %810 = vmatpush1.bf16.msra.mxu0 0
        %811 = vmatprep.subr.bf16.mxu0 0
        %812 = vmatpush1.bf16.msra.mxu0 0
        %813 = vmatprep.subr.bf16.mxu0 0
        %814 = vmatpush1.bf16.msra.mxu0 0
        %815 = vmatprep.subr.bf16.mxu0 0
        %816 = vmatpush1.bf16.msra.mxu0 0
        %817 = vmatprep.subr.bf16.mxu0 0
        %818 = vmatpush1.bf16.msra.mxu0 0
        %819 = vmatprep.subr.bf16.mxu0 0
        %820 = vmatpush1.bf16.msra.mxu0 0
        %821 = vmatprep.subr.bf16.mxu0 0
        %822 = vmatpush1.bf16.msra.mxu0 0
        %823 = vmatprep.mubr.bf16.mxu0 0
        %824 = vmatmul.mubr.bf16.gmra.mrb[0].mxu0 %v726
        %v825 = vpop.f32.mrb[0].mxu0
        %v826 = vadd.f32 %v777, %v825
        %v827 = vpop.f32.mrb[0].mxu0
        %v828 = vpop.f32.mrb[0].mxu0
        %v829 = vpop.f32.mrb[0].mxu0
        %830 = vdwg.mxu0
        %v831 = vpack.c.bf16 %v701, %v701
        %v832 = vpack.c.bf16 %v763, %v763
        %v833 = vpack.c.bf16 %v826, %v826
        %vm834 = vcmask 64512
        %v836 = vsel %vm834, %v831, 0
        %v839 = vsel %vm834, %v832, 0
        %841 = vmatprep.subr.bf16.mxu0 0
        %842 = vmatpush1.bf16.xpose.msra.mxu0 %v839
        %843 = vmatprep.subr.bf16.mxu0 0
        %844 = vmatpush1.bf16.xpose.msra.mxu0 0
        %845 = vmatprep.subr.bf16.mxu0 0
        %846 = vmatpush1.bf16.xpose.msra.mxu0 0
        %847 = vmatprep.subr.bf16.mxu0 0
        %848 = vmatpush1.bf16.xpose.msra.mxu0 0
        %849 = vmatprep.subr.bf16.mxu0 0
        %850 = vmatpush1.bf16.xpose.msra.mxu0 0
        %851 = vmatprep.subr.bf16.mxu0 0
        %852 = vmatpush1.bf16.xpose.msra.mxu0 0
        %853 = vmatprep.subr.bf16.mxu0 0
        %854 = vmatpush1.bf16.xpose.msra.mxu0 0
        %855 = vmatprep.subr.bf16.mxu0 0
        %856 = vmatpush1.bf16.xpose.msra.mxu0 0
        %857 = vmatprep.subr.bf16.mxu0 0
        %858 = vmatpush1.bf16.xpose.msra.mxu0 0
        %859 = vmatprep.subr.bf16.mxu0 0
        %860 = vmatpush1.bf16.xpose.msra.mxu0 0
        %861 = vmatprep.subr.bf16.mxu0 0
        %862 = vmatpush1.bf16.xpose.msra.mxu0 0
        %863 = vmatprep.subr.bf16.mxu0 0
        %864 = vmatpush1.bf16.xpose.msra.mxu0 0
        %865 = vmatprep.subr.bf16.mxu0 0
        %866 = vmatpush1.bf16.xpose.msra.mxu0 0
        %867 = vmatprep.subr.bf16.mxu0 0
        %868 = vmatpush1.bf16.xpose.msra.mxu0 0
        %869 = vmatprep.subr.bf16.mxu0 0
        %870 = vmatpush1.bf16.xpose.msra.mxu0 0
        %871 = vmatprep.subr.bf16.mxu0 0
        %872 = vmatpush1.bf16.xpose.msra.mxu0 0
        %873 = vmatprep.mubr.bf16.mxu0 0
        %874 = vmatmul.mubr.bf16.gmra.mrb[0].mxu0 %v836
        %v875 = vpop.f32.mrb[0].mxu0
        %v876 = vadd.f32 0.0, %v875
        %v877 = vpop.f32.mrb[0].mxu0
        %v878 = vpop.f32.mrb[0].mxu0
        %v879 = vpop.f32.mrb[0].mxu0
        %880 = vdwg.mxu0
        %v881 = vsel %vm604, %v876, -1e+09
        %v882 = vsel %vm834, %v881, -inf
        %883 = vmax.xlane.f32.xlu0 %v882
        %v884 = vpop.xlane.xlu0 %883
        %v885 = vsub.f32 %v881, %v884
        %v886 = vmul.f32 %v885, 1.442695
        %v887 = vpow.pop %v886
        %v888 = vsel %vm834, %v887, 0.0
        %889 = vadd.xlane.f32.xlu0 %v888
        %v890 = vpop.xlane.xlu0 %889
        %v891 = vrcp.pop %v890
        %v892 = vmul.f32 %v887, %v891
        %v893 = vpack.c.bf16 %v892, %v892
        %v895 = vsel %vm834, %v893, 0
        %vm897 = vcmask 1043456
        %v899 = vsel %vm897, %v833, 0
        %901 = vmatprep.subr.bf16.mxu0 0
        %902 = vmatpush1.bf16.msra.mxu0 %v899
        %903 = vmatprep.subr.bf16.mxu0 0
        %904 = vmatpush1.bf16.msra.mxu0 0
        %905 = vmatprep.subr.bf16.mxu0 0
        %906 = vmatpush1.bf16.msra.mxu0 0
        %907 = vmatprep.subr.bf16.mxu0 0
        %908 = vmatpush1.bf16.msra.mxu0 0
        %909 = vmatprep.subr.bf16.mxu0 0
        %910 = vmatpush1.bf16.msra.mxu0 0
        %911 = vmatprep.subr.bf16.mxu0 0
        %912 = vmatpush1.bf16.msra.mxu0 0
        %913 = vmatprep.subr.bf16.mxu0 0
        %914 = vmatpush1.bf16.msra.mxu0 0
        %915 = vmatprep.subr.bf16.mxu0 0
        %916 = vmatpush1.bf16.msra.mxu0 0
        %917 = vmatprep.subr.bf16.mxu0 0
        %918 = vmatpush1.bf16.msra.mxu0 0
        %919 = vmatprep.subr.bf16.mxu0 0
        %920 = vmatpush1.bf16.msra.mxu0 0
        %921 = vmatprep.subr.bf16.mxu0 0
        %922 = vmatpush1.bf16.msra.mxu0 0
        %923 = vmatprep.subr.bf16.mxu0 0
        %924 = vmatpush1.bf16.msra.mxu0 0
        %925 = vmatprep.subr.bf16.mxu0 0
        %926 = vmatpush1.bf16.msra.mxu0 0
        %927 = vmatprep.subr.bf16.mxu0 0
        %928 = vmatpush1.bf16.msra.mxu0 0
        %929 = vmatprep.subr.bf16.mxu0 0
        %930 = vmatpush1.bf16.msra.mxu0 0
        %931 = vmatprep.subr.bf16.mxu0 0
        %932 = vmatpush1.bf16.msra.mxu0 0
        %933 = vmatprep.mubr.bf16.mxu0 0
        %934 = vmatmul.mubr.bf16.gmra.mrb[0].mxu0 %v895
        %v935 = vpop.f32.mrb[0].mxu0
        %v936 = vadd.f32 0.0, %v935
        %v937 = vpop.f32.mrb[0].mxu0
        %v938 = vpop.f32.mrb[0].mxu0
        %v939 = vpop.f32.mrb[0].mxu0
        %940 = vdwg.mxu0
        %v941 = vpack.c.bf16 %v936, %v936
        %v942 = vld [vmem:[%s9] sm:$0xf]
        %944 = vrot.lane.b32.xlu0 %v831, 120
        %v945 = vpop.permute.xlu0 %944
        %947 = vrot.lane.b32.xlu0 %v832, 120
        %v948 = vpop.permute.xlu0 %947
        %v950 = vsel %vm834, %v945, 0
        %v953 = vsel %vm834, %v948, 0
        %955 = vmatprep.subr.bf16.mxu0 0
        %956 = vmatpush1.bf16.xpose.msra.mxu0 %v953
        %957 = vmatprep.subr.bf16.mxu0 0
        %958 = vmatpush1.bf16.xpose.msra.mxu0 0
        %959 = vmatprep.subr.bf16.mxu0 0
        %960 = vmatpush1.bf16.xpose.msra.mxu0 0
        %961 = vmatprep.subr.bf16.mxu0 0
        %962 = vmatpush1.bf16.xpose.msra.mxu0 0
        %963 = vmatprep.subr.bf16.mxu0 0
        %964 = vmatpush1.bf16.xpose.msra.mxu0 0
        %965 = vmatprep.subr.bf16.mxu0 0
        %966 = vmatpush1.bf16.xpose.msra.mxu0 0
        %967 = vmatprep.subr.bf16.mxu0 0
        %968 = vmatpush1.bf16.xpose.msra.mxu0 0
        %969 = vmatprep.subr.bf16.mxu0 0
        %970 = vmatpush1.bf16.xpose.msra.mxu0 0
        %971 = vmatprep.subr.bf16.mxu0 0
        %972 = vmatpush1.bf16.xpose.msra.mxu0 0
        %973 = vmatprep.subr.bf16.mxu0 0
        %974 = vmatpush1.bf16.xpose.msra.mxu0 0
        %975 = vmatprep.subr.bf16.mxu0 0
        %976 = vmatpush1.bf16.xpose.msra.mxu0 0
        %977 = vmatprep.subr.bf16.mxu0 0
        %978 = vmatpush1.bf16.xpose.msra.mxu0 0
        %979 = vmatprep.subr.bf16.mxu0 0
        %980 = vmatpush1.bf16.xpose.msra.mxu0 0
        %981 = vmatprep.subr.bf16.mxu0 0
        %982 = vmatpush1.bf16.xpose.msra.mxu0 0
        %983 = vmatprep.subr.bf16.mxu0 0
        %984 = vmatpush1.bf16.xpose.msra.mxu0 0
        %985 = vmatprep.subr.bf16.mxu0 0
        %986 = vmatpush1.bf16.xpose.msra.mxu0 0
        %987 = vmatprep.mubr.bf16.mxu0 0
        %988 = vmatmul.mubr.bf16.gmra.mrb[0].mxu0 %v950
        %v989 = vpop.f32.mrb[0].mxu0
        %v990 = vadd.f32 0.0, %v989
        %v991 = vpop.f32.mrb[0].mxu0
        %v992 = vpop.f32.mrb[0].mxu0
        %v993 = vpop.f32.mrb[0].mxu0
        %994 = vdwg.mxu0
        %v995 = vsel %vm604, %v990, -1e+09
        %v996 = vsel %vm834, %v995, -inf
        %997 = vmax.xlane.f32.xlu0 %v996
        %v998 = vpop.xlane.xlu0 %997
        %v999 = vsub.f32 %v995, %v998
        %v1000 = vmul.f32 %v999, 1.442695
        %v1001 = vpow.pop %v1000
        %v1002 = vsel %vm834, %v1001, 0.0
        %1003 = vadd.xlane.f32.xlu0 %v1002
        %v1004 = vpop.xlane.xlu0 %1003
        %v1005 = vrcp.pop %v1004
        %v1006 = vmul.f32 %v1001, %v1005
        %v1007 = vpack.c.bf16 %v1006, %v1006
        %1009 = vrot.lane.b32.xlu0 %v833, 120
        %v1010 = vpop.permute.xlu0 %1009
        %v1012 = vsel %vm834, %v1007, 0
        %v1015 = vsel %vm897, %v1010, 0
        %1017 = vmatprep.subr.bf16.mxu0 0
        %1018 = vmatpush1.bf16.msra.mxu0 %v1015
        %1019 = vmatprep.subr.bf16.mxu0 0
        %1020 = vmatpush1.bf16.msra.mxu0 0
        %1021 = vmatprep.subr.bf16.mxu0 0
        %1022 = vmatpush1.bf16.msra.mxu0 0
        %1023 = vmatprep.subr.bf16.mxu0 0
        %1024 = vmatpush1.bf16.msra.mxu0 0
        %1025 = vmatprep.subr.bf16.mxu0 0
        %1026 = vmatpush1.bf16.msra.mxu0 0
        %1027 = vmatprep.subr.bf16.mxu0 0
        %1028 = vmatpush1.bf16.msra.mxu0 0
        %1029 = vmatprep.subr.bf16.mxu0 0
        %1030 = vmatpush1.bf16.msra.mxu0 0
        %1031 = vmatprep.subr.bf16.mxu0 0
        %1032 = vmatpush1.bf16.msra.mxu0 0
        %1033 = vmatprep.subr.bf16.mxu0 0
        %1034 = vmatpush1.bf16.msra.mxu0 0
        %1035 = vmatprep.subr.bf16.mxu0 0
        %1036 = vmatpush1.bf16.msra.mxu0 0
        %1037 = vmatprep.subr.bf16.mxu0 0
        %1038 = vmatpush1.bf16.msra.mxu0 0
        %1039 = vmatprep.subr.bf16.mxu0 0
        %1040 = vmatpush1.bf16.msra.mxu0 0
        %1041 = vmatprep.subr.bf16.mxu0 0
        %1042 = vmatpush1.bf16.msra.mxu0 0
        %1043 = vmatprep.subr.bf16.mxu0 0
        %1044 = vmatpush1.bf16.msra.mxu0 0
        %1045 = vmatprep.subr.bf16.mxu0 0
        %1046 = vmatpush1.bf16.msra.mxu0 0
        %1047 = vmatprep.subr.bf16.mxu0 0
        %1048 = vmatpush1.bf16.msra.mxu0 0
        %1049 = vmatprep.mubr.bf16.mxu0 0
        %1050 = vmatmul.mubr.bf16.gmra.mrb[0].mxu0 %v1012
        %v1051 = vpop.f32.mrb[0].mxu0
        %v1052 = vadd.f32 0.0, %v1051
        %v1053 = vpop.f32.mrb[0].mxu0
        %v1054 = vpop.f32.mrb[0].mxu0
        %v1055 = vpop.f32.mrb[0].mxu0
        %1056 = vdwg.mxu0
        %v1057 = vpack.c.bf16 %v1052, %v1052
        %s1058 = scalar_lea.vmem %s9, 4
        %v1059 = vld [vmem:[%s1058] sm:$0xf]
        %v1061 = vsel %vm834, %v1057, 0
        %v1064 = vsel %vm897, %v1059, 0
        %1066 = vmatprep.subr.bf16.mxu0 0
        %1067 = vmatpush1.bf16.msra.mxu0 %v1064
        %1068 = vmatprep.subr.bf16.mxu0 0
        %1069 = vmatpush1.bf16.msra.mxu0 0
        %1070 = vmatprep.subr.bf16.mxu0 0
        %1071 = vmatpush1.bf16.msra.mxu0 0
        %1072 = vmatprep.subr.bf16.mxu0 0
        %1073 = vmatpush1.bf16.msra.mxu0 0
        %1074 = vmatprep.subr.bf16.mxu0 0
        %1075 = vmatpush1.bf16.msra.mxu0 0
        %1076 = vmatprep.subr.bf16.mxu0 0
        %1077 = vmatpush1.bf16.msra.mxu0 0
        %1078 = vmatprep.subr.bf16.mxu0 0
        %1079 = vmatpush1.bf16.msra.mxu0 0
        %1080 = vmatprep.subr.bf16.mxu0 0
        %1081 = vmatpush1.bf16.msra.mxu0 0
        %1082 = vmatprep.subr.bf16.mxu0 0
        %1083 = vmatpush1.bf16.msra.mxu0 0
        %1084 = vmatprep.subr.bf16.mxu0 0
        %1085 = vmatpush1.bf16.msra.mxu0 0
        %1086 = vmatprep.subr.bf16.mxu0 0
        %1087 = vmatpush1.bf16.msra.mxu0 0
        %1088 = vmatprep.subr.bf16.mxu0 0
        %1089 = vmatpush1.bf16.msra.mxu0 0
        %1090 = vmatprep.subr.bf16.mxu0 0
        %1091 = vmatpush1.bf16.msra.mxu0 0
        %1092 = vmatprep.subr.bf16.mxu0 0
        %1093 = vmatpush1.bf16.msra.mxu0 0
        %1094 = vmatprep.subr.bf16.mxu0 0
        %1095 = vmatpush1.bf16.msra.mxu0 0
        %1096 = vmatprep.subr.bf16.mxu0 0
        %1097 = vmatpush1.bf16.msra.mxu0 0
        %1098 = vmatprep.mubr.bf16.mxu0 0
        %1099 = vmatmul.mubr.bf16.gmra.mrb[0].mxu0 %v1061
        %v1100 = vpop.f32.mrb[0].mxu0
        %v1101 = vadd.f32 0.0, %v1100
        %v1102 = vpop.f32.mrb[0].mxu0
        %v1103 = vpop.f32.mrb[0].mxu0
        %v1104 = vpop.f32.mrb[0].mxu0
        %1105 = vdwg.mxu0
        %v1107 = vsel %vm834, %v941, 0
        %v1110 = vsel %vm897, %v942, 0
        %1112 = vmatprep.subr.bf16.mxu0 0
        %1113 = vmatpush1.bf16.msra.mxu0 %v1110
        %1114 = vmatprep.subr.bf16.mxu0 0
        %1115 = vmatpush1.bf16.msra.mxu0 0
        %1116 = vmatprep.subr.bf16.mxu0 0
        %1117 = vmatpush1.bf16.msra.mxu0 0
        %1118 = vmatprep.subr.bf16.mxu0 0
        %1119 = vmatpush1.bf16.msra.mxu0 0
        %1120 = vmatprep.subr.bf16.mxu0 0
        %1121 = vmatpush1.bf16.msra.mxu0 0
        %1122 = vmatprep.subr.bf16.mxu0 0
        %1123 = vmatpush1.bf16.msra.mxu0 0
        %1124 = vmatprep.subr.bf16.mxu0 0
        %1125 = vmatpush1.bf16.msra.mxu0 0
        %1126 = vmatprep.subr.bf16.mxu0 0
        %1127 = vmatpush1.bf16.msra.mxu0 0
        %1128 = vmatprep.subr.bf16.mxu0 0
        %1129 = vmatpush1.bf16.msra.mxu0 0
        %1130 = vmatprep.subr.bf16.mxu0 0
        %1131 = vmatpush1.bf16.msra.mxu0 0
        %1132 = vmatprep.subr.bf16.mxu0 0
        %1133 = vmatpush1.bf16.msra.mxu0 0
        %1134 = vmatprep.subr.bf16.mxu0 0
        %1135 = vmatpush1.bf16.msra.mxu0 0
        %1136 = vmatprep.subr.bf16.mxu0 0
        %1137 = vmatpush1.bf16.msra.mxu0 0
        %1138 = vmatprep.subr.bf16.mxu0 0
        %1139 = vmatpush1.bf16.msra.mxu0 0
        %1140 = vmatprep.subr.bf16.mxu0 0
        %1141 = vmatpush1.bf16.msra.mxu0 0
        %1142 = vmatprep.subr.bf16.mxu0 0
        %1143 = vmatpush1.bf16.msra.mxu0 0
        %1144 = vmatprep.mubr.bf16.mxu0 0
        %1145 = vmatmul.mubr.bf16.gmra.mrb[0].mxu0 %v1107
        %v1146 = vpop.f32.mrb[0].mxu0
        %v1147 = vadd.f32 %v1101, %v1146
        %v1148 = vpop.f32.mrb[0].mxu0
        %v1149 = vpop.f32.mrb[0].mxu0
        %v1150 = vpop.f32.mrb[0].mxu0
        %1151 = vdwg.mxu0
        %1152 = vrot.lane.b32.xlu0 %v831, 112
        %v1153 = vpop.permute.xlu0 %1152
        %1154 = vrot.lane.b32.xlu0 %v832, 112
        %v1155 = vpop.permute.xlu0 %1154
        %v1157 = vsel %vm834, %v1153, 0
        %v1160 = vsel %vm834, %v1155, 0
        %1162 = vmatprep.subr.bf16.mxu0 0
        %1163 = vmatpush1.bf16.xpose.msra.mxu0 %v1160
        %1164 = vmatprep.subr.bf16.mxu0 0
        %1165 = vmatpush1.bf16.xpose.msra.mxu0 0
        %1166 = vmatprep.subr.bf16.mxu0 0
        %1167 = vmatpush1.bf16.xpose.msra.mxu0 0
        %1168 = vmatprep.subr.bf16.mxu0 0
        %1169 = vmatpush1.bf16.xpose.msra.mxu0 0
        %1170 = vmatprep.subr.bf16.mxu0 0
        %1171 = vmatpush1.bf16.xpose.msra.mxu0 0
        %1172 = vmatprep.subr.bf16.mxu0 0
        %1173 = vmatpush1.bf16.xpose.msra.mxu0 0
        %1174 = vmatprep.subr.bf16.mxu0 0
        %1175 = vmatpush1.bf16.xpose.msra.mxu0 0
        %1176 = vmatprep.subr.bf16.mxu0 0
        %1177 = vmatpush1.bf16.xpose.msra.mxu0 0
        %1178 = vmatprep.subr.bf16.mxu0 0
        %1179 = vmatpush1.bf16.xpose.msra.mxu0 0
        %1180 = vmatprep.subr.bf16.mxu0 0
        %1181 = vmatpush1.bf16.xpose.msra.mxu0 0
        %1182 = vmatprep.subr.bf16.mxu0 0
        %1183 = vmatpush1.bf16.xpose.msra.mxu0 0
        %1184 = vmatprep.subr.bf16.mxu0 0
        %1185 = vmatpush1.bf16.xpose.msra.mxu0 0
        %1186 = vmatprep.subr.bf16.mxu0 0
        %1187 = vmatpush1.bf16.xpose.msra.mxu0 0
        %1188 = vmatprep.subr.bf16.mxu0 0
        %1189 = vmatpush1.bf16.xpose.msra.mxu0 0
        %1190 = vmatprep.subr.bf16.mxu0 0
        %1191 = vmatpush1.bf16.xpose.msra.mxu0 0
        %1192 = vmatprep.subr.bf16.mxu0 0
        %1193 = vmatpush1.bf16.xpose.msra.mxu0 0
        %1194 = vmatprep.mubr.bf16.mxu0 0
        %1195 = vmatmul.mubr.bf16.gmra.mrb[0].mxu0 %v1157
        %v1196 = vpop.f32.mrb[0].mxu0
        %v1197 = vadd.f32 0.0, %v1196
        %v1198 = vpop.f32.mrb[0].mxu0
        %v1199 = vpop.f32.mrb[0].mxu0
        %v1200 = vpop.f32.mrb[0].mxu0
        %1201 = vdwg.mxu0
        %v1202 = vsel %vm604, %v1197, -1e+09
        %v1203 = vsel %vm834, %v1202, -inf
        %1204 = vmax.xlane.f32.xlu0 %v1203
        %v1205 = vpop.xlane.xlu0 %1204
        %v1206 = vsub.f32 %v1202, %v1205
        %v1207 = vmul.f32 %v1206, 1.442695
        %v1208 = vpow.pop %v1207
        %v1209 = vsel %vm834, %v1208, 0.0
        %1210 = vadd.xlane.f32.xlu0 %v1209
        %v1211 = vpop.xlane.xlu0 %1210
        %v1212 = vrcp.pop %v1211
        %v1213 = vmul.f32 %v1208, %v1212
        %v1214 = vpack.c.bf16 %v1213, %v1213
        %1215 = vrot.lane.b32.xlu0 %v833, 112
        %v1216 = vpop.permute.xlu0 %1215
        %v1218 = vsel %vm834, %v1214, 0
        %v1221 = vsel %vm897, %v1216, 0
        %1223 = vmatprep.subr.bf16.mxu0 0
        %1224 = vmatpush1.bf16.msra.mxu0 %v1221
        %1225 = vmatprep.subr.bf16.mxu0 0
        %1226 = vmatpush1.bf16.msra.mxu0 0
        %1227 = vmatprep.subr.bf16.mxu0 0
        %1228 = vmatpush1.bf16.msra.mxu0 0
        %1229 = vmatprep.subr.bf16.mxu0 0
        %1230 = vmatpush1.bf16.msra.mxu0 0
        %1231 = vmatprep.subr.bf16.mxu0 0
        %1232 = vmatpush1.bf16.msra.mxu0 0
        %1233 = vmatprep.subr.bf16.mxu0 0
        %1234 = vmatpush1.bf16.msra.mxu0 0
        %1235 = vmatprep.subr.bf16.mxu0 0
        %1236 = vmatpush1.bf16.msra.mxu0 0
        %1237 = vmatprep.subr.bf16.mxu0 0
        %1238 = vmatpush1.bf16.msra.mxu0 0
        %1239 = vmatprep.subr.bf16.mxu0 0
        %1240 = vmatpush1.bf16.msra.mxu0 0
        %1241 = vmatprep.subr.bf16.mxu0 0
        %1242 = vmatpush1.bf16.msra.mxu0 0
        %1243 = vmatprep.subr.bf16.mxu0 0
        %1244 = vmatpush1.bf16.msra.mxu0 0
        %1245 = vmatprep.subr.bf16.mxu0 0
        %1246 = vmatpush1.bf16.msra.mxu0 0
        %1247 = vmatprep.subr.bf16.mxu0 0
        %1248 = vmatpush1.bf16.msra.mxu0 0
        %1249 = vmatprep.subr.bf16.mxu0 0
        %1250 = vmatpush1.bf16.msra.mxu0 0
        %1251 = vmatprep.subr.bf16.mxu0 0
        %1252 = vmatpush1.bf16.msra.mxu0 0
        %1253 = vmatprep.subr.bf16.mxu0 0
        %1254 = vmatpush1.bf16.msra.mxu0 0
        %1255 = vmatprep.mubr.bf16.mxu0 0
        %1256 = vmatmul.mubr.bf16.gmra.mrb[0].mxu0 %v1218
        %v1257 = vpop.f32.mrb[0].mxu0
        %v1258 = vadd.f32 0.0, %v1257
        %v1259 = vpop.f32.mrb[0].mxu0
        %v1260 = vpop.f32.mrb[0].mxu0
        %v1261 = vpop.f32.mrb[0].mxu0
        %1262 = vdwg.mxu0
        %v1263 = vpack.c.bf16 %v1258, %v1258
        %s1264 = scalar_lea.vmem %s9, 8
        %v1265 = vld [vmem:[%s1264] sm:$0xf]
        %v1267 = vsel %vm834, %v1263, 0
        %v1270 = vsel %vm897, %v1265, 0
        %1272 = vmatprep.subr.bf16.mxu0 0
        %1273 = vmatpush1.bf16.msra.mxu0 %v1270
        %1274 = vmatprep.subr.bf16.mxu0 0
        %1275 = vmatpush1.bf16.msra.mxu0 0
        %1276 = vmatprep.subr.bf16.mxu0 0
        %1277 = vmatpush1.bf16.msra.mxu0 0
        %1278 = vmatprep.subr.bf16.mxu0 0
        %1279 = vmatpush1.bf16.msra.mxu0 0
        %1280 = vmatprep.subr.bf16.mxu0 0
        %1281 = vmatpush1.bf16.msra.mxu0 0
        %1282 = vmatprep.subr.bf16.mxu0 0
        %1283 = vmatpush1.bf16.msra.mxu0 0
        %1284 = vmatprep.subr.bf16.mxu0 0
        %1285 = vmatpush1.bf16.msra.mxu0 0
        %1286 = vmatprep.subr.bf16.mxu0 0
        %1287 = vmatpush1.bf16.msra.mxu0 0
        %1288 = vmatprep.subr.bf16.mxu0 0
        %1289 = vmatpush1.bf16.msra.mxu0 0
        %1290 = vmatprep.subr.bf16.mxu0 0
        %1291 = vmatpush1.bf16.msra.mxu0 0
        %1292 = vmatprep.subr.bf16.mxu0 0
        %1293 = vmatpush1.bf16.msra.mxu0 0
        %1294 = vmatprep.subr.bf16.mxu0 0
        %1295 = vmatpush1.bf16.msra.mxu0 0
        %1296 = vmatprep.subr.bf16.mxu0 0
        %1297 = vmatpush1.bf16.msra.mxu0 0
        %1298 = vmatprep.subr.bf16.mxu0 0
        %1299 = vmatpush1.bf16.msra.mxu0 0
        %1300 = vmatprep.subr.bf16.mxu0 0
        %1301 = vmatpush1.bf16.msra.mxu0 0
        %1302 = vmatprep.subr.bf16.mxu0 0
        %1303 = vmatpush1.bf16.msra.mxu0 0
        %1304 = vmatprep.mubr.bf16.mxu0 0
        %1305 = vmatmul.mubr.bf16.gmra.mrb[0].mxu0 %v1267
        %v1306 = vpop.f32.mrb[0].mxu0
        %v1307 = vadd.f32 0.0, %v1306
        %v1308 = vpop.f32.mrb[0].mxu0
        %v1309 = vpop.f32.mrb[0].mxu0
        %v1310 = vpop.f32.mrb[0].mxu0
        %1311 = vdwg.mxu0
        %v1312 = vadd.f32 %v1147, %v1307
        %1313 = vrot.lane.b32.xlu0 %v831, 104
        %v1314 = vpop.permute.xlu0 %1313
        %1315 = vrot.lane.b32.xlu0 %v832, 104
        %v1316 = vpop.permute.xlu0 %1315
        %v1318 = vsel %vm834, %v1314, 0
        %v1321 = vsel %vm834, %v1316, 0
        %1323 = vmatprep.subr.bf16.mxu0 0
        %1324 = vmatpush1.bf16.xpose.msra.mxu0 %v1321
        %1325 = vmatprep.subr.bf16.mxu0 0
        %1326 = vmatpush1.bf16.xpose.msra.mxu0 0
        %1327 = vmatprep.subr.bf16.mxu0 0
        %1328 = vmatpush1.bf16.xpose.msra.mxu0 0
        %1329 = vmatprep.subr.bf16.mxu0 0
        %1330 = vmatpush1.bf16.xpose.msra.mxu0 0
        %1331 = vmatprep.subr.bf16.mxu0 0
        %1332 = vmatpush1.bf16.xpose.msra.mxu0 0
        %1333 = vmatprep.subr.bf16.mxu0 0
        %1334 = vmatpush1.bf16.xpose.msra.mxu0 0
        %1335 = vmatprep.subr.bf16.mxu0 0
        %1336 = vmatpush1.bf16.xpose.msra.mxu0 0
        %1337 = vmatprep.subr.bf16.mxu0 0
        %1338 = vmatpush1.bf16.xpose.msra.mxu0 0
        %1339 = vmatprep.subr.bf16.mxu0 0
        %1340 = vmatpush1.bf16.xpose.msra.mxu0 0
        %1341 = vmatprep.subr.bf16.mxu0 0
        %1342 = vmatpush1.bf16.xpose.msra.mxu0 0
        %1343 = vmatprep.subr.bf16.mxu0 0
        %1344 = vmatpush1.bf16.xpose.msra.mxu0 0
        %1345 = vmatprep.subr.bf16.mxu0 0
        %1346 = vmatpush1.bf16.xpose.msra.mxu0 0
        %1347 = vmatprep.subr.bf16.mxu0 0
        %1348 = vmatpush1.bf16.xpose.msra.mxu0 0
        %1349 = vmatprep.subr.bf16.mxu0 0
        %1350 = vmatpush1.bf16.xpose.msra.mxu0 0
        %1351 = vmatprep.subr.bf16.mxu0 0
        %1352 = vmatpush1.bf16.xpose.msra.mxu0 0
        %1353 = vmatprep.subr.bf16.mxu0 0
        %1354 = vmatpush1.bf16.xpose.msra.mxu0 0
        %1355 = vmatprep.mubr.bf16.mxu0 0
        %1356 = vmatmul.mubr.bf16.gmra.mrb[0].mxu0 %v1318
        %v1357 = vpop.f32.mrb[0].mxu0
        %v1358 = vadd.f32 0.0, %v1357
        %v1359 = vpop.f32.mrb[0].mxu0
        %v1360 = vpop.f32.mrb[0].mxu0
        %v1361 = vpop.f32.mrb[0].mxu0
        %1362 = vdwg.mxu0
        %v1363 = vsel %vm604, %v1358, -1e+09
        %v1364 = vsel %vm834, %v1363, -inf
        %1365 = vmax.xlane.f32.xlu0 %v1364
        %v1366 = vpop.xlane.xlu0 %1365
        %v1367 = vsub.f32 %v1363, %v1366
        %v1368 = vmul.f32 %v1367, 1.442695
        %v1369 = vpow.pop %v1368
        %v1370 = vsel %vm834, %v1369, 0.0
        %1371 = vadd.xlane.f32.xlu0 %v1370
        %v1372 = vpop.xlane.xlu0 %1371
        %v1373 = vrcp.pop %v1372
        %v1374 = vmul.f32 %v1369, %v1373
        %v1375 = vpack.c.bf16 %v1374, %v1374
        %1376 = vrot.lane.b32.xlu0 %v833, 104
        %v1377 = vpop.permute.xlu0 %1376
        %v1379 = vsel %vm834, %v1375, 0
        %v1382 = vsel %vm897, %v1377, 0
        %1384 = vmatprep.subr.bf16.mxu0 0
        %1385 = vmatpush1.bf16.msra.mxu0 %v1382
        %1386 = vmatprep.subr.bf16.mxu0 0
        %1387 = vmatpush1.bf16.msra.mxu0 0
        %1388 = vmatprep.subr.bf16.mxu0 0
        %1389 = vmatpush1.bf16.msra.mxu0 0
        %1390 = vmatprep.subr.bf16.mxu0 0
        %1391 = vmatpush1.bf16.msra.mxu0 0
        %1392 = vmatprep.subr.bf16.mxu0 0
        %1393 = vmatpush1.bf16.msra.mxu0 0
        %1394 = vmatprep.subr.bf16.mxu0 0
        %1395 = vmatpush1.bf16.msra.mxu0 0
        %1396 = vmatprep.subr.bf16.mxu0 0
        %1397 = vmatpush1.bf16.msra.mxu0 0
        %1398 = vmatprep.subr.bf16.mxu0 0
        %1399 = vmatpush1.bf16.msra.mxu0 0
        %1400 = vmatprep.subr.bf16.mxu0 0
        %1401 = vmatpush1.bf16.msra.mxu0 0
        %1402 = vmatprep.subr.bf16.mxu0 0
        %1403 = vmatpush1.bf16.msra.mxu0 0
        %1404 = vmatprep.subr.bf16.mxu0 0
        %1405 = vmatpush1.bf16.msra.mxu0 0
        %1406 = vmatprep.subr.bf16.mxu0 0
        %1407 = vmatpush1.bf16.msra.mxu0 0
        %1408 = vmatprep.subr.bf16.mxu0 0
        %1409 = vmatpush1.bf16.msra.mxu0 0
        %1410 = vmatprep.subr.bf16.mxu0 0
        %1411 = vmatpush1.bf16.msra.mxu0 0
        %1412 = vmatprep.subr.bf16.mxu0 0
        %1413 = vmatpush1.bf16.msra.mxu0 0
        %1414 = vmatprep.subr.bf16.mxu0 0
        %1415 = vmatpush1.bf16.msra.mxu0 0
        %1416 = vmatprep.mubr.bf16.mxu0 0
        %1417 = vmatmul.mubr.bf16.gmra.mrb[0].mxu0 %v1379
        %v1418 = vpop.f32.mrb[0].mxu0
        %v1419 = vadd.f32 0.0, %v1418
        %v1420 = vpop.f32.mrb[0].mxu0
        %v1421 = vpop.f32.mrb[0].mxu0
        %v1422 = vpop.f32.mrb[0].mxu0
        %1423 = vdwg.mxu0
        %v1424 = vpack.c.bf16 %v1419, %v1419
        %s1425 = scalar_lea.vmem %s9, 12
        %v1426 = vld [vmem:[%s1425] sm:$0xf]
        %v1428 = vsel %vm834, %v1424, 0
        %v1431 = vsel %vm897, %v1426, 0
        %1433 = vmatprep.subr.bf16.mxu0 0
        %1434 = vmatpush1.bf16.msra.mxu0 %v1431
        %1435 = vmatprep.subr.bf16.mxu0 0
        %1436 = vmatpush1.bf16.msra.mxu0 0
        %1437 = vmatprep.subr.bf16.mxu0 0
        %1438 = vmatpush1.bf16.msra.mxu0 0
        %1439 = vmatprep.subr.bf16.mxu0 0
        %1440 = vmatpush1.bf16.msra.mxu0 0
        %1441 = vmatprep.subr.bf16.mxu0 0
        %1442 = vmatpush1.bf16.msra.mxu0 0
        %1443 = vmatprep.subr.bf16.mxu0 0
        %1444 = vmatpush1.bf16.msra.mxu0 0
        %1445 = vmatprep.subr.bf16.mxu0 0
        %1446 = vmatpush1.bf16.msra.mxu0 0
        %1447 = vmatprep.subr.bf16.mxu0 0
        %1448 = vmatpush1.bf16.msra.mxu0 0
        %1449 = vmatprep.subr.bf16.mxu0 0
        %1450 = vmatpush1.bf16.msra.mxu0 0
        %1451 = vmatprep.subr.bf16.mxu0 0
        %1452 = vmatpush1.bf16.msra.mxu0 0
        %1453 = vmatprep.subr.bf16.mxu0 0
        %1454 = vmatpush1.bf16.msra.mxu0 0
        %1455 = vmatprep.subr.bf16.mxu0 0
        %1456 = vmatpush1.bf16.msra.mxu0 0
        %1457 = vmatprep.subr.bf16.mxu0 0
        %1458 = vmatpush1.bf16.msra.mxu0 0
        %1459 = vmatprep.subr.bf16.mxu0 0
        %1460 = vmatpush1.bf16.msra.mxu0 0
        %1461 = vmatprep.subr.bf16.mxu0 0
        %1462 = vmatpush1.bf16.msra.mxu0 0
        %1463 = vmatprep.subr.bf16.mxu0 0
        %1464 = vmatpush1.bf16.msra.mxu0 0
        %1465 = vmatprep.mubr.bf16.mxu0 0
        %1466 = vmatmul.mubr.bf16.gmra.mrb[0].mxu0 %v1428
        %v1467 = vpop.f32.mrb[0].mxu0
        %v1468 = vadd.f32 0.0, %v1467
        %v1469 = vpop.f32.mrb[0].mxu0
        %v1470 = vpop.f32.mrb[0].mxu0
        %v1471 = vpop.f32.mrb[0].mxu0
        %1472 = vdwg.mxu0
        %v1473 = vadd.f32 %v1312, %v1468
        %v1474 = vld [vmem:[%s10] sm:$0x1]
        %v1476 = vlaneseq
        %v1477 = vshrl.u32 %v1476, 7
        %v1478 = vsub.s32 0, %v1477
        %v1479 = vrot.slane %v1474, %v1478
        %v1481 = vadd.f32 %v1473, %v1479
        %v1482 = vadd.f32 %v600, %v1481
        %v1483 = vsel %vm605, %v1482, 0.0
        %1484 = vadd.xlane.f32.xlu0 %v1483
        %v1485 = vpop.xlane.xlu0 %1484
        %v1486 = vmul.f32 %v1485, %v609
        %v1487 = vsub.f32 %v1482, %v1486
        %v1488 = vmul.f32 %v1487, %v1487
        %v1489 = vsel %vm605, %v1488, 0.0
        %1490 = vadd.xlane.f32.xlu0 %v1489
        %v1491 = vpop.xlane.xlu0 %1490
        %v1492 = vmul.f32 %v1491, %v609
        %v1493 = vadd.f32 %v1492, 1e-05
        %v1494 = vrsqrt.pop %v1493
        %v1495 = vmul.f32 %v1487, %v1494
        %v1496 = vpack.c.bf16 %v1495, %v1495
        %v1497 = vld [vmem:[#allocation7] sm:$0xf]
        %v1498 = vld [vmem:[#allocation7 + $0x4] sm:$0xf]
        %v1499 = vld [vmem:[#allocation7 + $0x8] sm:$0xf]
        %v1500 = vld [vmem:[#allocation7 + $0xc] sm:$0xf]
        %v1501 = vld [vmem:[%s12] sm:$0x1]
        %v1503 = vlaneseq
        %v1504 = vshrl.u32 %v1503, 7
        %v1505 = vsub.s32 0, %v1504
        %v1506 = vrot.slane %v1501, %v1505
        %v1512 = vunpack.c.l.b16 %v1497
        %v1513 = vunpack.c.l.b16 %v1498
        %v1514 = vunpack.c.l.b16 %v1499
        %v1515 = vunpack.c.l.b16 %v1500
        %v1516 = vpack.c.b16 %v1513, %v1512
        %v1517 = vpack.c.b16 %v1515, %v1514
        %v1521 = vsel %vm605, %v1496, 0
        %1523 = vmatprep.subr.bf16.mxu0 0
        %1524 = vmatpush1.bf16.msra.mxu0 %v1516
        %1525 = vmatprep.subr.bf16.mxu0 0
        %1526 = vmatpush1.bf16.msra.mxu0 %v1517
        %1527 = vmatprep.subr.bf16.mxu0 0
        %1528 = vmatpush1.bf16.msra.mxu0 0
        %1529 = vmatprep.subr.bf16.mxu0 0
        %1530 = vmatpush1.bf16.msra.mxu0 0
        %1531 = vmatprep.subr.bf16.mxu0 0
        %1532 = vmatpush1.bf16.msra.mxu0 0
        %1533 = vmatprep.subr.bf16.mxu0 0
        %1534 = vmatpush1.bf16.msra.mxu0 0
        %1535 = vmatprep.subr.bf16.mxu0 0
        %1536 = vmatpush1.bf16.msra.mxu0 0
        %1537 = vmatprep.subr.bf16.mxu0 0
        %1538 = vmatpush1.bf16.msra.mxu0 0
        %1539 = vmatprep.subr.bf16.mxu0 0
        %1540 = vmatpush1.bf16.msra.mxu0 0
        %1541 = vmatprep.subr.bf16.mxu0 0
        %1542 = vmatpush1.bf16.msra.mxu0 0
        %1543 = vmatprep.subr.bf16.mxu0 0
        %1544 = vmatpush1.bf16.msra.mxu0 0
        %1545 = vmatprep.subr.bf16.mxu0 0
        %1546 = vmatpush1.bf16.msra.mxu0 0
        %1547 = vmatprep.subr.bf16.mxu0 0
        %1548 = vmatpush1.bf16.msra.mxu0 0
        %1549 = vmatprep.subr.bf16.mxu0 0
        %1550 = vmatpush1.bf16.msra.mxu0 0
        %1551 = vmatprep.subr.bf16.mxu0 0
        %1552 = vmatpush1.bf16.msra.mxu0 0
        %1553 = vmatprep.subr.bf16.mxu0 0
        %1554 = vmatpush1.bf16.msra.mxu0 0
        %1555 = vmatprep.mubr.bf16.mxu0 0
        %1556 = vmatmul.mubr.bf16.gmra.mrb[0].mxu0 %v1521
        %v1557 = vpop.f32.mrb[0].mxu0
        %v1558 = vadd.f32 %v1506, %v1557
        %v1559 = vpop.f32.mrb[0].mxu0
        %v1560 = vpop.f32.mrb[0].mxu0
        %v1561 = vpop.f32.mrb[0].mxu0
        %1562 = vdwg.mxu0
        %v1563 = vmax.f32 %v1558, 0.0
        %v1564 = vpack.c.bf16 %v1563, %v1563
        %v1565 = vld [vmem:[%s13] sm:$0xf]
        %v1566 = vld [vmem:[%s13 + $0x4] sm:$0xf]
        %v1567 = vld [vmem:[%s13 + $0x8] sm:$0xf]
        %v1568 = vld [vmem:[%s13 + $0xc] sm:$0xf]
        %v1569 = vld [vmem:[%s13 + $0x10] sm:$0xf]
        %v1570 = vld [vmem:[%s13 + $0x14] sm:$0xf]
        %v1571 = vld [vmem:[%s13 + $0x18] sm:$0xf]
        %v1572 = vld [vmem:[%s13 + $0x1c] sm:$0xf]
        %v1573 = vld [vmem:[%s13 + $0x20] sm:$0xf]
        %v1574 = vld [vmem:[%s13 + $0x24] sm:$0xf]
        %v1575 = vld [vmem:[%s13 + $0x28] sm:$0xf]
        %v1576 = vld [vmem:[%s13 + $0x2c] sm:$0xf]
        %v1577 = vld [vmem:[%s13 + $0x30] sm:$0xf]
        %v1578 = vld [vmem:[%s13 + $0x34] sm:$0xf]
        %v1579 = vld [vmem:[%s13 + $0x38] sm:$0xf]
        %v1580 = vld [vmem:[%s13 + $0x3c] sm:$0xf]
        %v1581 = vld [vmem:[%s14] sm:$0x1]
        %v1583 = vlaneseq
        %v1584 = vshrl.u32 %v1583, 7
        %v1585 = vsub.s32 0, %v1584
        %v1586 = vrot.slane %v1581, %v1585
        %v1604 = vunpack.c.l.b16 %v1565
        %v1605 = vunpack.c.l.b16 %v1566
        %v1606 = vunpack.c.l.b16 %v1567
        %v1607 = vunpack.c.l.b16 %v1568
        %v1608 = vunpack.c.l.b16 %v1569
        %v1609 = vunpack.c.l.b16 %v1570
        %v1610 = vunpack.c.l.b16 %v1571
        %v1611 = vunpack.c.l.b16 %v1572
        %v1612 = vunpack.c.l.b16 %v1573
        %v1613 = vunpack.c.l.b16 %v1574
        %v1614 = vunpack.c.l.b16 %v1575
        %v1615 = vunpack.c.l.b16 %v1576
        %v1616 = vunpack.c.l.b16 %v1577
        %v1617 = vunpack.c.l.b16 %v1578
        %v1618 = vunpack.c.l.b16 %v1579
        %v1619 = vunpack.c.l.b16 %v1580
        %v1620 = vpack.c.b16 %v1605, %v1604
        %v1621 = vpack.c.b16 %v1607, %v1606
        %v1622 = vpack.c.b16 %v1609, %v1608
        %v1623 = vpack.c.b16 %v1611, %v1610
        %v1624 = vpack.c.b16 %v1613, %v1612
        %v1625 = vpack.c.b16 %v1615, %v1614
        %v1626 = vpack.c.b16 %v1617, %v1616
        %v1627 = vpack.c.b16 %v1619, %v1618
        %1636 = vmatprep.subr.bf16.mxu0 0
        %1637 = vmatpush1.bf16.msra.mxu0 %v1620
        %1638 = vmatprep.subr.bf16.mxu0 0
        %1639 = vmatpush1.bf16.msra.mxu0 %v1621
        %1640 = vmatprep.subr.bf16.mxu0 0
        %1641 = vmatpush1.bf16.msra.mxu0 %v1622
        %1642 = vmatprep.subr.bf16.mxu0 0
        %1643 = vmatpush1.bf16.msra.mxu0 %v1623
        %1644 = vmatprep.subr.bf16.mxu0 0
        %1645 = vmatpush1.bf16.msra.mxu0 %v1624
        %1646 = vmatprep.subr.bf16.mxu0 0
        %1647 = vmatpush1.bf16.msra.mxu0 %v1625
        %1648 = vmatprep.subr.bf16.mxu0 0
        %1649 = vmatpush1.bf16.msra.mxu0 %v1626
        %1650 = vmatprep.subr.bf16.mxu0 0
        %1651 = vmatpush1.bf16.msra.mxu0 %v1627
        %1652 = vmatprep.subr.bf16.mxu0 0
        %1653 = vmatpush1.bf16.msra.mxu0 0
        %1654 = vmatprep.subr.bf16.mxu0 0
        %1655 = vmatpush1.bf16.msra.mxu0 0
        %1656 = vmatprep.subr.bf16.mxu0 0
        %1657 = vmatpush1.bf16.msra.mxu0 0
        %1658 = vmatprep.subr.bf16.mxu0 0
        %1659 = vmatpush1.bf16.msra.mxu0 0
        %1660 = vmatprep.subr.bf16.mxu0 0
        %1661 = vmatpush1.bf16.msra.mxu0 0
        %1662 = vmatprep.subr.bf16.mxu0 0
        %1663 = vmatpush1.bf16.msra.mxu0 0
        %1664 = vmatprep.subr.bf16.mxu0 0
        %1665 = vmatpush1.bf16.msra.mxu0 0
        %1666 = vmatprep.subr.bf16.mxu0 0
        %1667 = vmatpush1.bf16.msra.mxu0 0
        %1668 = vmatprep.mubr.bf16.mxu0 0
        %1669 = vmatmul.mubr.bf16.gmra.mrb[0].mxu0 %v1564
        %v1670 = vpop.f32.mrb[0].mxu0
        %v1671 = vadd.f32 %v1586, %v1670
        %v1672 = vpop.f32.mrb[0].mxu0
        %v1673 = vpop.f32.mrb[0].mxu0
        %v1674 = vpop.f32.mrb[0].mxu0
        %1675 = vdwg.mxu0
        %v1676 = vadd.f32 %v1482, %v1671
        %1677 = vst.msk [vmem:[%s587] sm:$0xff] %vm605, %v1676
        %s1678 = sand.u32 %s389, 1
        %s1679 = scalar_lea.sflag [#allocation4], %s1678
        %s1680 = sand.u32 %s389, 1
        %s1681 = smul.addr %s1680, 8
        %s1682 = scalar_lea.vmem [#allocation8], %s1681
        // Predicated region
        $region93: #{tpu_custom_call.1} parent=79 // pred_check
          %p1683 = pneg %p399
        $region94: #{tpu_custom_call.1} parent=79 // pred_check_branch
          %1685 = sbr.rel (%p1683) target = $region96
        $region95: #{tpu_custom_call.1} parent=79 // pred_region
          %s1687 = ssub.s32 128, 128
          %1688 = vsyncadd %s1679, %s1687
          %s1689 = sadd.s32 %s38, %s37
          %s1690 = smul.addr %s1689, 128
          %s1691 = scalar_lea.hbm %s15, %s1690
          %s1693 = sshll.u32 %s1682, 4
          %s1694 = int_to_ptr.vmem [resolvable:$true] %s1693
          %1696 = dma.vmem_to_hbm [thread:$0]  %s1694, 128, %s1691, %s1679
        $region96: #{tpu_custom_call.1} parent=79 // pred_fallthru
          _
      $region80: #{tpu_custom_call.1} parent=5 // pred_fallthru
        _
      %p1697 = scmp.le.s32.totalorder 2, %s28
      // Predicated region
      $region97: #{tpu_custom_call.1} parent=5 // pred_check
        %p1698 = pneg %p1697
      $region98: #{tpu_custom_call.1} parent=5 // pred_check_branch
        %1700 = sbr.rel (%p1698) target = $region100
      $region99: #{tpu_custom_call.1} parent=5 // pred_region
        %s1701 = ssub.s32 %s28, 2
        // Predicated region
        $region101: #{tpu_custom_call.1} parent=99 // pred_check
          %p1702 = pneg %p405
        $region102: #{tpu_custom_call.1} parent=99 // pred_check_branch
          %1704 = sbr.rel (%p1702) target = $region104
        $region103: #{tpu_custom_call.1} parent=99 // pred_region
          %s1705 = sand.u32 %s390, 1
          %s1706 = scalar_lea.sflag [#allocation4], %s1705
          %s1707 = sand.u32 %s390, 1
          %s1708 = smul.addr %s1707, 8
          %s1709 = scalar_lea.vmem [#allocation8], %s1708
          %1710 = dma.done %s1706, 128
        $region104: #{tpu_custom_call.1} parent=99 // pred_fallthru
          _
      $region100: #{tpu_custom_call.1} parent=5 // pred_fallthru
        _
    $region6: #{tpu_custom_call.1} parent=1 // loop_footer
      %s32 = sadd.s32 1, %s28
    $region7: #{tpu_custom_call.1} parent=1 // loop_footer_branch
      %27 = sbr.rel target = $region3
    $region8: #{tpu_custom_call.1} parent=1 // loop_exit
      _
    %1711 = vsyncpa [#allocation3], 1
    %s1712 = scalar_lea.sflag [#allocation3], 1
    %1713 = vsyncpa %s1712, 1
    %1714 = vsyncpa [#allocation6], 1
    %1715 = vsyncpa [#allocation4], 1
    %s1716 = scalar_lea.sflag [#allocation4], 1
    %1717 = vsyncpa %s1716, 1

</llo_original>
